<compile_context>
chip_gen: v6e
topology: v6e:2x2x1
jax: 0.10.0
libtpu: 0.0.40
codegen_flags: <defaults>
</compile_context>

<pallas_src>
import functools
import math

import jax
import jax.numpy as jnp
from jax.experimental import pallas as pl
from jax.experimental.pallas import tpu as pltpu


def encoder_layer_kernel(src_ref, mask_ref, kT_ref, v_ref,
                         wq_ref, bq_ref, wo_ref, bo_ref,
                         ln_g_ref, ln_b_ref,
                         w1_ref, b1_ref, w2_ref, b2_ref,
                         out_ref,
                         *, n_heads, inv_scale, eps):
    _, tq, H = src_ref.shape
    S = kT_ref.shape[-1]

    x_q = src_ref[0]                                       # [tq, H] (src dtype)
    x_q32 = x_q.astype(jnp.float32)
    x_qc = x_q.astype(wq_ref.dtype)                        # LHS matched to weight dtype

    # Additive key-padding bias, broadcast ONCE per tile (not per head).
    mask = mask_ref[0]                                     # [1, S]
    bias = jnp.where(mask == 0, jnp.float32(-1e10), jnp.float32(0.0))
    bias_b = jnp.broadcast_to(bias, (tq, S))               # [tq, S]

    inv_scale_f = jnp.float32(inv_scale)

    def head_body(h, acc):
        # Q projection for this head; 1/sqrt(head_dim) folded into Q once.
        q_h = (jnp.dot(x_qc, wq_ref[h], preferred_element_type=jnp.float32)
               + bq_ref[h]) * inv_scale_f                              # [tq, hd] f32
        # Energy: plain [tq,hd] @ [hd,S] — K is stored pre-transposed & lane-dense.
        energy = jnp.dot(q_h.astype(kT_ref.dtype), kT_ref[h],
                         preferred_element_type=jnp.float32) + bias_b  # [tq, S]
        m = jnp.max(energy, axis=-1, keepdims=True)
        p = jnp.exp(energy - m)
        denom = jnp.sum(p, axis=-1, keepdims=True)
        attn = p * pl.reciprocal(denom, approx=False)                  # softmax
        # attention-dropout is identity in eval mode
        ctx = jnp.dot(attn.astype(v_ref.dtype), v_ref[h],
                      preferred_element_type=jnp.float32)              # [tq, hd]
        # fc_o accumulated per head (sum_h ctx_h @ Wo_h) -> no concatenate
        return acc + jnp.dot(ctx.astype(wo_ref.dtype), wo_ref[h],
                             preferred_element_type=jnp.float32)

    acc0 = jnp.zeros((tq, H), jnp.float32)
    if n_heads >= 8:
        # Bounded live ranges / code size for many heads.
        attn_out = jax.lax.fori_loop(0, n_heads, head_body, acc0, unroll=2)
    else:
        attn_out = acc0
        for h in range(n_heads):
            attn_out = head_body(h, attn_out)
    attn_out = attn_out + bo_ref[...].astype(jnp.float32)              # [tq, H]

    gamma = ln_g_ref[...].astype(jnp.float32)                          # [1, H]
    beta = ln_b_ref[...].astype(jnp.float32)

    def layer_norm(v):                                                 # f32 stats, EUP rsqrt
        mu = jnp.mean(v, axis=-1, keepdims=True)
        var = jnp.mean((v - mu) ** 2, axis=-1, keepdims=True)          # biased, like PyTorch
        return (v - mu) * jax.lax.rsqrt(var + eps) * gamma + beta

    # residual + norm 1 (dropout is identity in eval mode)
    x1 = layer_norm(x_q32 + attn_out)

    # position-wise feed-forward; LHS cast to the weight dtype before each MXU dot
    h1 = jnp.maximum(jnp.dot(x1.astype(w1_ref.dtype), w1_ref[...],
                             preferred_element_type=jnp.float32)
                     + b1_ref[...].astype(jnp.float32), 0.0)
    ff = jnp.dot(h1.astype(w2_ref.dtype), w2_ref[...],
                 preferred_element_type=jnp.float32) + b2_ref[...].astype(jnp.float32)

    # residual + norm 2 (the module reuses the SAME LayerNorm parameters)
    out = layer_norm(x1 + ff)
    out_ref[0] = out.astype(out_ref.dtype)


def _split_heads(w, b, n_heads):
    """[H, D] weight, [1, D] bias  ->  [n_heads, H, D/n], [n_heads, 1, D/n]."""
    H, D = w.shape
    hd = D // n_heads
    w_h = jnp.transpose(w.reshape(H, n_heads, hd), (1, 0, 2))
    b_h = jnp.transpose(b.reshape(1, n_heads, hd), (1, 0, 2))
    return w_h, b_h


def _vmem_limit_bytes(required):
    """Scoped-VMEM limit derived from actual buffer needs, capped by physical VMEM."""
    phys = 128 * 1024 * 1024
    try:
        info = pltpu.get_tpu_info()
        phys = int(getattr(info, "vmem_capacity_bytes", phys))
    except Exception:
        pass
    cap = max(32 * 1024 * 1024, phys - 8 * 1024 * 1024)      # leave compiler headroom
    want = max(64 * 1024 * 1024, 2 * int(required))
    return int(max(32 * 1024 * 1024, min(cap, want)))


def encoder_layer(src, mask, params, *, n_heads, tq=None, eps=1e-5):
    B, S, H = src.shape
    pf_dim = params["w1"].shape[1]
    assert H % n_heads == 0, "hid_dim must be divisible by n_heads"
    hd = H // n_heads
    inv_scale = 1.0 / math.sqrt(hd)

    if tq is None:
        tq = S
        for cand in (256, 128, 64, 32, 16, 8):
            if S >= cand and S % cand == 0:
                tq = cand
                break
    assert S % tq == 0 and (tq % 8 == 0 or tq == S)
    n_q = S // tq

    # bf16 MXU path when activations are bf16; exact f32 otherwise.
    mm_dtype = jnp.bfloat16 if src.dtype == jnp.bfloat16 else jnp.float32
    mm_item = 2 if mm_dtype == jnp.bfloat16 else 4

    # --- Hoisted K/V projection: one fused full-shape matmul per call (full MXU shape),
    #     head-major layout, K pre-transposed so its last (lane) dim is S.
    x32 = src.astype(jnp.float32)
    wkv = jnp.concatenate([params["wk"], params["wv"]], axis=1).astype(jnp.float32)  # [H, 2H]
    bkv = jnp.concatenate([params["bk"], params["bv"]], axis=1).astype(jnp.float32)  # [1, 2H]
    kv = jnp.einsum("bsh,hd->bsd", x32, wkv) + bkv                                   # [B, S, 2H]
    k, v = jnp.split(kv, 2, axis=-1)
    kT = k.reshape(B, S, n_heads, hd).transpose(0, 2, 3, 1).astype(mm_dtype)  # [B, nh, hd, S]
    vh = v.reshape(B, S, n_heads, hd).transpose(0, 2, 1, 3).astype(mm_dtype)  # [B, nh, S, hd]

    # Head-major Q / O parameters (layout plumbing done once, outside the kernel).
    wq_h, bq_h = _split_heads(params["wq"], params["bq"], n_heads)
    wo_h = params["wo"].reshape(n_heads, hd, H)

    wq_h = wq_h.astype(mm_dtype)
    wo_h = wo_h.astype(mm_dtype)
    w1 = params["w1"].astype(mm_dtype)
    w2 = params["w2"].astype(mm_dtype)
    bq_h = bq_h.astype(jnp.float32)
    bo = params["bo"].astype(jnp.float32)
    b1 = params["b1"].astype(jnp.float32)
    b2 = params["b2"].astype(jnp.float32)
    ln_g = params["ln_g"].astype(jnp.float32)
    ln_b = params["ln_b"].astype(jnp.float32)

    kernel = functools.partial(encoder_layer_kernel,
                               n_heads=n_heads, inv_scale=inv_scale, eps=eps)

    # Parameters are constant across the grid: whole-array VMEM-resident (no re-DMA).
    param_spec = pl.BlockSpec(memory_space=pltpu.MemorySpace.VMEM)

    in_specs = [
        pl.BlockSpec((1, tq, H), lambda b, i: (b, i, 0)),                 # query tile (+ residual)
        pl.BlockSpec((1, 1, S), lambda b, i: (b, 0, 0)),                  # key padding mask
        pl.BlockSpec((None, n_heads, hd, S), lambda b, i: (b, 0, 0, 0)),  # K^T, per batch
        pl.BlockSpec((None, n_heads, S, hd), lambda b, i: (b, 0, 0, 0)),  # V, per batch
    ] + [param_spec] * 10

    operands = (src, mask, kT, vh, wq_h, bq_h, wo_h, bo, ln_g, ln_b, w1, b1, w2, b2)

    # Advisory cost estimate (K/V projection now happens outside the kernel).
    flops = int(B * (4 * S * H * H + 4 * S * S * H + 4 * S * H * pf_dim))
    transcendentals = int(B * n_heads * S * S)
    bytes_accessed = int(sum(int(a.size) * a.dtype.itemsize for a in operands)
                         + src.size * src.dtype.itemsize)

    # VMEM plan: double-buffered pipeline blocks + resident parameters.
    param_bytes = sum(int(a.size) * a.dtype.itemsize
                      for a in (wq_h, bq_h, wo_h, bo, ln_g, ln_b, w1, b1, w2, b2))
    block_bytes = 2 * (tq * H * src.dtype.itemsize          # input tile
                       + S * mask.dtype.itemsize            # mask row
                       + 2 * S * H * mm_item                # K^T + V per-batch blocks
                       + tq * H * src.dtype.itemsize)       # output tile
    vmem_limit = _vmem_limit_bytes(param_bytes + block_bytes)

    return pl.pallas_call(
        kernel,
        out_shape=jax.ShapeDtypeStruct((B, S, H), src.dtype),
        grid_spec=pltpu.PrefetchScalarGridSpec(
            num_scalar_prefetch=0,
            grid=(B, n_q),
            in_specs=in_specs,
            out_specs=pl.BlockSpec((1, tq, H), lambda b, i: (b, i, 0)),
        ),
        compiler_params=pltpu.CompilerParams(
            # No cross-tile state anymore -> both axes independent (megacore-friendly).
            dimension_semantics=("parallel", "parallel"),
            vmem_limit_bytes=vmem_limit,
        ),
        cost_estimate=pl.CostEstimate(flops=flops, transcendentals=transcendentals,
                                      bytes_accessed=bytes_accessed),
    )(*operands)


def encoder_layer_ref(src, mask, params, *, n_heads):
    """Pure-JAX reference (mirrors the PyTorch module in eval mode)."""
    B, S, H = src.shape
    hd = H // n_heads
    scale = float(hd) ** 0.5
    x = src.astype(jnp.float32)

    def lin(v, w, b):
        return v @ w + b

    q = lin(x, params["wq"], params["bq"]).reshape(B, S, n_heads, hd).transpose(0, 2, 1, 3)
    k = lin(x, params["wk"], params["bk"]).reshape(B, S, n_heads, hd).transpose(0, 2, 1, 3)
    v = lin(x, params["wv"], params["bv"]).reshape(B, S, n_heads, hd).transpose(0, 2, 1, 3)
    energy = jnp.einsum("bhqd,bhkd->bhqk", q, k) / scale
    energy = jnp.where(mask[:, None, :, :] == 0, -1e10, energy)
    attn = jax.nn.softmax(energy, axis=-1)
    o = jnp.einsum("bhqk,bhkd->bhqd", attn, v).transpose(0, 2, 1, 3).reshape(B, S, H)
    o = lin(o, params["wo"], params["bo"])

    def ln_(v):
        mu = jnp.mean(v, axis=-1, keepdims=True)
        var = jnp.mean((v - mu) ** 2, axis=-1, keepdims=True)
        return (v - mu) / jnp.sqrt(var + 1e-5) * params["ln_g"][0] + params["ln_b"][0]

    x1 = ln_(x + o)
    ff = jnp.maximum(lin(x1, params["w1"], params["b1"]), 0.0)
    ff = lin(ff, params["w2"], params["b2"])
    return ln_(x1 + ff)


if __name__ == "__main__":
    def make_params(key, H, PF):
        ks = jax.random.split(key, 12)

        def w(k, shape, s=0.05):
            return jax.random.normal(k, shape, jnp.float32) * s

        return {
            "wq": w(ks[0], (H, H)), "bq": w(ks[1], (1, H)),
            "wk": w(ks[2], (H, H)), "bk": w(ks[3], (1, H)),
            "wv": w(ks[4], (H, H)), "bv": w(ks[5], (1, H)),
            "wo": w(ks[6], (H, H)), "bo": w(ks[7], (1, H)),
            "ln_g": jnp.ones((1, H), jnp.float32),
            "ln_b": jnp.zeros((1, H), jnp.float32),
            "w1": w(ks[8], (H, PF)), "b1": w(ks[9], (1, PF)),
            "w2": w(ks[10], (PF, H)), "b2": w(ks[11], (1, H)),
        }

    key = jax.random.PRNGKey(0)

    # Case 1: small shapes, statically-unrolled head loop (n_heads < 8).
    B, S, H, NH, PF = 2, 16, 32, 4, 64
    params = make_params(jax.random.fold_in(key, 1), H, PF)
    src = jax.random.normal(jax.random.fold_in(key, 2), (B, S, H), jnp.float32)
    mask = jnp.ones((B, 1, S), jnp.float32).at[1, 0, -3:].set(0.0)
    out = jax.block_until_ready(encoder_layer(src, mask, params, n_heads=NH))
    ref = encoder_layer_ref(src, mask, params, n_heads=NH)
    assert out.shape == (B, S, H)
    assert jnp.allclose(out, ref, atol=2e-3, rtol=2e-3), "case-1 mismatch vs reference"

    # Case 2: multiple query tiles + fori_loop head path (n_heads >= 8).
    B, S, H, NH, PF, TQ = 2, 128, 64, 8, 128, 64
    params = make_params(jax.random.fold_in(key, 3), H, PF)
    src = jax.random.normal(jax.random.fold_in(key, 4), (B, S, H), jnp.float32)
    mask = jnp.ones((B, 1, S), jnp.float32).at[0, 0, -17:].set(0.0)
    out = jax.block_until_ready(encoder_layer(src, mask, params, n_heads=NH, tq=TQ))
    ref = encoder_layer_ref(src, mask, params, n_heads=NH)
    assert out.shape == (B, S, H)
    assert jnp.allclose(out, ref, atol=2e-3, rtol=2e-3), "case-2 mismatch vs reference"

    print("KERNEL_OK")
</pallas_src>

<mosaic_0001>
module attributes {stable_mosaic.version = 11 : i64} {
  func.func @encoder_layer_kernel(%arg0: i32, %arg1: i32, %arg2: memref<1x16x32xf32, #tpu.memory_space<vmem>>, %arg3: memref<1x1x16xf32, #tpu.memory_space<vmem>>, %arg4: memref<1x4x8x16xf32, #tpu.memory_space<vmem>>, %arg5: memref<1x4x16x8xf32, #tpu.memory_space<vmem>>, %arg6: memref<4x32x8xf32, #tpu.memory_space<vmem>>, %arg7: memref<4x1x8xf32, #tpu.memory_space<vmem>>, %arg8: memref<4x8x32xf32, #tpu.memory_space<vmem>>, %arg9: memref<1x32xf32, #tpu.memory_space<vmem>>, %arg10: memref<1x32xf32, #tpu.memory_space<vmem>>, %arg11: memref<1x32xf32, #tpu.memory_space<vmem>>, %arg12: memref<32x64xf32, #tpu.memory_space<vmem>>, %arg13: memref<1x64xf32, #tpu.memory_space<vmem>>, %arg14: memref<64x32xf32, #tpu.memory_space<vmem>>, %arg15: memref<1x32xf32, #tpu.memory_space<vmem>>, %arg16: memref<1x16x32xf32, #tpu.memory_space<vmem>>) attributes {dimension_semantics = [#tpu.dimension_semantics<parallel>, #tpu.dimension_semantics<parallel>], iteration_bounds = array<i64: 2, 1>, scalar_prefetch = 0 : i64, scratch_operands = 0 : i64, tpu.core_type = #tpu.core_type<tc>, window_params = [{transform_indices = @transform_0, window_bounds = array<i64: 1, 16, 32>}, {transform_indices = @transform_1, window_bounds = array<i64: 1, 1, 16>}, {transform_indices = @transform_2, window_bounds = array<i64: 1, 4, 8, 16>}, {transform_indices = @transform_3, window_bounds = array<i64: 1, 4, 16, 8>}, {pipeline_mode = #tpu.pipeline_mode<synchronous>, transform_indices = @transform_4, window_bounds = array<i64: 4, 32, 8>}, {pipeline_mode = #tpu.pipeline_mode<synchronous>, transform_indices = @transform_5, window_bounds = array<i64: 4, 1, 8>}, {pipeline_mode = #tpu.pipeline_mode<synchronous>, transform_indices = @transform_6, window_bounds = array<i64: 4, 8, 32>}, {pipeline_mode = #tpu.pipeline_mode<synchronous>, transform_indices = @transform_7, window_bounds = array<i64: 1, 32>}, {pipeline_mode = #tpu.pipeline_mode<synchronous>, transform_indices = @transform_8, window_bounds = array<i64: 1, 32>}, {pipeline_mode = #tpu.pipeline_mode<synchronous>, transform_indices = @transform_9, window_bounds = array<i64: 1, 32>}, {pipeline_mode = #tpu.pipeline_mode<synchronous>, transform_indices = @transform_10, window_bounds = array<i64: 32, 64>}, {pipeline_mode = #tpu.pipeline_mode<synchronous>, transform_indices = @transform_11, window_bounds = array<i64: 1, 64>}, {pipeline_mode = #tpu.pipeline_mode<synchronous>, transform_indices = @transform_12, window_bounds = array<i64: 64, 32>}, {pipeline_mode = #tpu.pipeline_mode<synchronous>, transform_indices = @transform_13, window_bounds = array<i64: 1, 32>}, {transform_indices = @transform_14, window_bounds = array<i64: 1, 16, 32>}]} {
    %c0 = arith.constant 0 : index
    %c0_0 = arith.constant 0 : index
    %c0_1 = arith.constant 0 : index
    %0 = vector.load %arg2[%c0, %c0_0, %c0_1] : memref<1x16x32xf32, #tpu.memory_space<vmem>>, vector<1x16x32xf32>
    %1 = vector.shape_cast %0 : vector<1x16x32xf32> to vector<16x32xf32>
    %c0_2 = arith.constant 0 : index
    %c0_3 = arith.constant 0 : index
    %c0_4 = arith.constant 0 : index
    %2 = vector.load %arg3[%c0_2, %c0_3, %c0_4] : memref<1x1x16xf32, #tpu.memory_space<vmem>>, vector<1x1x16xf32>
    %3 = vector.shape_cast %2 : vector<1x1x16xf32> to vector<1x16xf32>
    %cst = arith.constant 0.000000e+00 : f32
    %4 = vector.broadcast %cst : f32 to vector<1x16xf32>
    %5 = arith.cmpf oeq, %3, %4 : vector<1x16xf32>
    %cst_5 = arith.constant -1.000000e+10 : f32
    %cst_6 = arith.constant 0.000000e+00 : f32
    %6 = vector.broadcast %cst_5 : f32 to vector<1x16xf32>
    %7 = vector.broadcast %cst_6 : f32 to vector<1x16xf32>
    %8 = arith.select %5, %6, %7 : vector<1x16xi1>, vector<1x16xf32>
    %9 = vector.shape_cast %8 : vector<1x16xf32> to vector<1x16xf32>
    %10 = vector.broadcast %9 : vector<1x16xf32> to vector<16x16xf32>
    %cst_7 = arith.constant 0.000000e+00 : f32
    %11 = vector.broadcast %cst_7 : f32 to vector<16x32xf32>
    %c0_8 = arith.constant 0 : index
    %c0_9 = arith.constant 0 : index
    %c0_10 = arith.constant 0 : index
    %12 = vector.load %arg6[%c0_8, %c0_9, %c0_10] : memref<4x32x8xf32, #tpu.memory_space<vmem>>, vector<1x32x8xf32>
    %13 = vector.shape_cast %12 : vector<1x32x8xf32> to vector<32x8xf32>
    %cst_11 = arith.constant dense<0.000000e+00> : vector<16x8xf32>
    %14 = tpu.matmul %1, %13, %cst_11 {dimension_numbers = #tpu.dot_dimension_numbers<[1], [0], [0], [1], [0, 0, 1, 1], [], []>} : vector<16x32xf32>, vector<32x8xf32>, vector<16x8xf32> -> vector<16x8xf32>
    %c0_12 = arith.constant 0 : index
    %c0_13 = arith.constant 0 : index
    %c0_14 = arith.constant 0 : index
    %15 = vector.load %arg7[%c0_12, %c0_13, %c0_14] : memref<4x1x8xf32, #tpu.memory_space<vmem>>, vector<1x1x8xf32>
    %16 = vector.shape_cast %15 : vector<1x1x8xf32> to vector<1x8xf32>
    %17 = vector.broadcast %16 : vector<1x8xf32> to vector<16x8xf32>
    %18 = arith.addf %14, %17 : vector<16x8xf32>
    %cst_15 = arith.constant 0.353553385 : f32
    %19 = vector.broadcast %cst_15 : f32 to vector<16x8xf32>
    %20 = arith.mulf %18, %19 : vector<16x8xf32>
    %c0_16 = arith.constant 0 : index
    %c0_17 = arith.constant 0 : index
    %c0_18 = arith.constant 0 : index
    %c0_19 = arith.constant 0 : index
    %21 = vector.load %arg4[%c0_16, %c0_17, %c0_18, %c0_19] : memref<1x4x8x16xf32, #tpu.memory_space<vmem>>, vector<1x1x8x16xf32>
    %22 = vector.shape_cast %21 : vector<1x1x8x16xf32> to vector<8x16xf32>
    %cst_20 = arith.constant dense<0.000000e+00> : vector<16x16xf32>
    %23 = tpu.matmul %20, %22, %cst_20 {dimension_numbers = #tpu.dot_dimension_numbers<[1], [0], [0], [1], [0, 0, 1, 1], [], []>} : vector<16x8xf32>, vector<8x16xf32>, vector<16x16xf32> -> vector<16x16xf32>
    %24 = arith.addf %23, %10 : vector<16x16xf32>
    %cst_21 = arith.constant dense<0xFF800000> : vector<16xf32>
    %25 = vector.multi_reduction <maximumf>, %24, %cst_21 [1] : vector<16x16xf32> to vector<16xf32>
    %26 = vector.shape_cast %25 : vector<16xf32> to vector<16x1xf32>
    %27 = vector.broadcast %26 : vector<16x1xf32> to vector<16x16xf32>
    %28 = arith.subf %24, %27 : vector<16x16xf32>
    %29 = math.exp %28 : vector<16x16xf32>
    %cst_22 = arith.constant dense<0.000000e+00> : vector<16xf32>
    %30 = vector.multi_reduction <add>, %29, %cst_22 [1] : vector<16x16xf32> to vector<16xf32>
    %31 = vector.shape_cast %30 : vector<16xf32> to vector<16x1xf32>
    %32 = tpu.reciprocal %31 : vector<16x1xf32> -> vector<16x1xf32>
    %33 = vector.broadcast %32 : vector<16x1xf32> to vector<16x16xf32>
    %34 = arith.mulf %29, %33 : vector<16x16xf32>
    %c0_23 = arith.constant 0 : index
    %c0_24 = arith.constant 0 : index
    %c0_25 = arith.constant 0 : index
    %c0_26 = arith.constant 0 : index
    %35 = vector.load %arg5[%c0_23, %c0_24, %c0_25, %c0_26] : memref<1x4x16x8xf32, #tpu.memory_space<vmem>>, vector<1x1x16x8xf32>
    %36 = vector.shape_cast %35 : vector<1x1x16x8xf32> to vector<16x8xf32>
    %cst_27 = arith.constant dense<0.000000e+00> : vector<16x8xf32>
    %37 = tpu.matmul %34, %36, %cst_27 {dimension_numbers = #tpu.dot_dimension_numbers<[1], [0], [0], [1], [0, 0, 1, 1], [], []>} : vector<16x16xf32>, vector<16x8xf32>, vector<16x8xf32> -> vector<16x8xf32>
    %c0_28 = arith.constant 0 : index
    %c0_29 = arith.constant 0 : index
    %c0_30 = arith.constant 0 : index
    %38 = vector.load %arg8[%c0_28, %c0_29, %c0_30] : memref<4x8x32xf32, #tpu.memory_space<vmem>>, vector<1x8x32xf32>
    %39 = vector.shape_cast %38 : vector<1x8x32xf32> to vector<8x32xf32>
    %cst_31 = arith.constant dense<0.000000e+00> : vector<16x32xf32>
    %40 = tpu.matmul %37, %39, %cst_31 {dimension_numbers = #tpu.dot_dimension_numbers<[1], [0], [0], [1], [0, 0, 1, 1], [], []>} : vector<16x8xf32>, vector<8x32xf32>, vector<16x32xf32> -> vector<16x32xf32>
    %41 = arith.addf %11, %40 : vector<16x32xf32>
    %c1 = arith.constant 1 : index
    %c0_32 = arith.constant 0 : index
    %c0_33 = arith.constant 0 : index
    %42 = vector.load %arg6[%c1, %c0_32, %c0_33] : memref<4x32x8xf32, #tpu.memory_space<vmem>>, vector<1x32x8xf32>
    %43 = vector.shape_cast %42 : vector<1x32x8xf32> to vector<32x8xf32>
    %cst_34 = arith.constant dense<0.000000e+00> : vector<16x8xf32>
    %44 = tpu.matmul %1, %43, %cst_34 {dimension_numbers = #tpu.dot_dimension_numbers<[1], [0], [0], [1], [0, 0, 1, 1], [], []>} : vector<16x32xf32>, vector<32x8xf32>, vector<16x8xf32> -> vector<16x8xf32>
    %c1_35 = arith.constant 1 : index
    %c0_36 = arith.constant 0 : index
    %c0_37 = arith.constant 0 : index
    %45 = vector.load %arg7[%c1_35, %c0_36, %c0_37] : memref<4x1x8xf32, #tpu.memory_space<vmem>>, vector<1x1x8xf32>
    %46 = vector.shape_cast %45 : vector<1x1x8xf32> to vector<1x8xf32>
    %47 = vector.broadcast %46 : vector<1x8xf32> to vector<16x8xf32>
    %48 = arith.addf %44, %47 : vector<16x8xf32>
    %cst_38 = arith.constant 0.353553385 : f32
    %49 = vector.broadcast %cst_38 : f32 to vector<16x8xf32>
    %50 = arith.mulf %48, %49 : vector<16x8xf32>
    %c0_39 = arith.constant 0 : index
    %c1_40 = arith.constant 1 : index
    %c0_41 = arith.constant 0 : index
    %c0_42 = arith.constant 0 : index
    %51 = vector.load %arg4[%c0_39, %c1_40, %c0_41, %c0_42] : memref<1x4x8x16xf32, #tpu.memory_space<vmem>>, vector<1x1x8x16xf32>
    %52 = vector.shape_cast %51 : vector<1x1x8x16xf32> to vector<8x16xf32>
    %cst_43 = arith.constant dense<0.000000e+00> : vector<16x16xf32>
    %53 = tpu.matmul %50, %52, %cst_43 {dimension_numbers = #tpu.dot_dimension_numbers<[1], [0], [0], [1], [0, 0, 1, 1], [], []>} : vector<16x8xf32>, vector<8x16xf32>, vector<16x16xf32> -> vector<16x16xf32>
    %54 = arith.addf %53, %10 : vector<16x16xf32>
    %cst_44 = arith.constant dense<0xFF800000> : vector<16xf32>
    %55 = vector.multi_reduction <maximumf>, %54, %cst_44 [1] : vector<16x16xf32> to vector<16xf32>
    %56 = vector.shape_cast %55 : vector<16xf32> to vector<16x1xf32>
    %57 = vector.broadcast %56 : vector<16x1xf32> to vector<16x16xf32>
    %58 = arith.subf %54, %57 : vector<16x16xf32>
    %59 = math.exp %58 : vector<16x16xf32>
    %cst_45 = arith.constant dense<0.000000e+00> : vector<16xf32>
    %60 = vector.multi_reduction <add>, %59, %cst_45 [1] : vector<16x16xf32> to vector<16xf32>
    %61 = vector.shape_cast %60 : vector<16xf32> to vector<16x1xf32>
    %62 = tpu.reciprocal %61 : vector<16x1xf32> -> vector<16x1xf32>
    %63 = vector.broadcast %62 : vector<16x1xf32> to vector<16x16xf32>
    %64 = arith.mulf %59, %63 : vector<16x16xf32>
    %c0_46 = arith.constant 0 : index
    %c1_47 = arith.constant 1 : index
    %c0_48 = arith.constant 0 : index
    %c0_49 = arith.constant 0 : index
    %65 = vector.load %arg5[%c0_46, %c1_47, %c0_48, %c0_49] : memref<1x4x16x8xf32, #tpu.memory_space<vmem>>, vector<1x1x16x8xf32>
    %66 = vector.shape_cast %65 : vector<1x1x16x8xf32> to vector<16x8xf32>
    %cst_50 = arith.constant dense<0.000000e+00> : vector<16x8xf32>
    %67 = tpu.matmul %64, %66, %cst_50 {dimension_numbers = #tpu.dot_dimension_numbers<[1], [0], [0], [1], [0, 0, 1, 1], [], []>} : vector<16x16xf32>, vector<16x8xf32>, vector<16x8xf32> -> vector<16x8xf32>
    %c1_51 = arith.constant 1 : index
    %c0_52 = arith.constant 0 : index
    %c0_53 = arith.constant 0 : index
    %68 = vector.load %arg8[%c1_51, %c0_52, %c0_53] : memref<4x8x32xf32, #tpu.memory_space<vmem>>, vector<1x8x32xf32>
    %69 = vector.shape_cast %68 : vector<1x8x32xf32> to vector<8x32xf32>
    %cst_54 = arith.constant dense<0.000000e+00> : vector<16x32xf32>
    %70 = tpu.matmul %67, %69, %cst_54 {dimension_numbers = #tpu.dot_dimension_numbers<[1], [0], [0], [1], [0, 0, 1, 1], [], []>} : vector<16x8xf32>, vector<8x32xf32>, vector<16x32xf32> -> vector<16x32xf32>
    %71 = arith.addf %41, %70 : vector<16x32xf32>
    %c2 = arith.constant 2 : index
    %c0_55 = arith.constant 0 : index
    %c0_56 = arith.constant 0 : index
    %72 = vector.load %arg6[%c2, %c0_55, %c0_56] : memref<4x32x8xf32, #tpu.memory_space<vmem>>, vector<1x32x8xf32>
    %73 = vector.shape_cast %72 : vector<1x32x8xf32> to vector<32x8xf32>
    %cst_57 = arith.constant dense<0.000000e+00> : vector<16x8xf32>
    %74 = tpu.matmul %1, %73, %cst_57 {dimension_numbers = #tpu.dot_dimension_numbers<[1], [0], [0], [1], [0, 0, 1, 1], [], []>} : vector<16x32xf32>, vector<32x8xf32>, vector<16x8xf32> -> vector<16x8xf32>
    %c2_58 = arith.constant 2 : index
    %c0_59 = arith.constant 0 : index
    %c0_60 = arith.constant 0 : index
    %75 = vector.load %arg7[%c2_58, %c0_59, %c0_60] : memref<4x1x8xf32, #tpu.memory_space<vmem>>, vector<1x1x8xf32>
    %76 = vector.shape_cast %75 : vector<1x1x8xf32> to vector<1x8xf32>
    %77 = vector.broadcast %76 : vector<1x8xf32> to vector<16x8xf32>
    %78 = arith.addf %74, %77 : vector<16x8xf32>
    %cst_61 = arith.constant 0.353553385 : f32
    %79 = vector.broadcast %cst_61 : f32 to vector<16x8xf32>
    %80 = arith.mulf %78, %79 : vector<16x8xf32>
    %c0_62 = arith.constant 0 : index
    %c2_63 = arith.constant 2 : index
    %c0_64 = arith.constant 0 : index
    %c0_65 = arith.constant 0 : index
    %81 = vector.load %arg4[%c0_62, %c2_63, %c0_64, %c0_65] : memref<1x4x8x16xf32, #tpu.memory_space<vmem>>, vector<1x1x8x16xf32>
    %82 = vector.shape_cast %81 : vector<1x1x8x16xf32> to vector<8x16xf32>
    %cst_66 = arith.constant dense<0.000000e+00> : vector<16x16xf32>
    %83 = tpu.matmul %80, %82, %cst_66 {dimension_numbers = #tpu.dot_dimension_numbers<[1], [0], [0], [1], [0, 0, 1, 1], [], []>} : vector<16x8xf32>, vector<8x16xf32>, vector<16x16xf32> -> vector<16x16xf32>
    %84 = arith.addf %83, %10 : vector<16x16xf32>
    %cst_67 = arith.constant dense<0xFF800000> : vector<16xf32>
    %85 = vector.multi_reduction <maximumf>, %84, %cst_67 [1] : vector<16x16xf32> to vector<16xf32>
    %86 = vector.shape_cast %85 : vector<16xf32> to vector<16x1xf32>
    %87 = vector.broadcast %86 : vector<16x1xf32> to vector<16x16xf32>
    %88 = arith.subf %84, %87 : vector<16x16xf32>
    %89 = math.exp %88 : vector<16x16xf32>
    %cst_68 = arith.constant dense<0.000000e+00> : vector<16xf32>
    %90 = vector.multi_reduction <add>, %89, %cst_68 [1] : vector<16x16xf32> to vector<16xf32>
    %91 = vector.shape_cast %90 : vector<16xf32> to vector<16x1xf32>
    %92 = tpu.reciprocal %91 : vector<16x1xf32> -> vector<16x1xf32>
    %93 = vector.broadcast %92 : vector<16x1xf32> to vector<16x16xf32>
    %94 = arith.mulf %89, %93 : vector<16x16xf32>
    %c0_69 = arith.constant 0 : index
    %c2_70 = arith.constant 2 : index
    %c0_71 = arith.constant 0 : index
    %c0_72 = arith.constant 0 : index
    %95 = vector.load %arg5[%c0_69, %c2_70, %c0_71, %c0_72] : memref<1x4x16x8xf32, #tpu.memory_space<vmem>>, vector<1x1x16x8xf32>
    %96 = vector.shape_cast %95 : vector<1x1x16x8xf32> to vector<16x8xf32>
    %cst_73 = arith.constant dense<0.000000e+00> : vector<16x8xf32>
    %97 = tpu.matmul %94, %96, %cst_73 {dimension_numbers = #tpu.dot_dimension_numbers<[1], [0], [0], [1], [0, 0, 1, 1], [], []>} : vector<16x16xf32>, vector<16x8xf32>, vector<16x8xf32> -> vector<16x8xf32>
    %c2_74 = arith.constant 2 : index
    %c0_75 = arith.constant 0 : index
    %c0_76 = arith.constant 0 : index
    %98 = vector.load %arg8[%c2_74, %c0_75, %c0_76] : memref<4x8x32xf32, #tpu.memory_space<vmem>>, vector<1x8x32xf32>
    %99 = vector.shape_cast %98 : vector<1x8x32xf32> to vector<8x32xf32>
    %cst_77 = arith.constant dense<0.000000e+00> : vector<16x32xf32>
    %100 = tpu.matmul %97, %99, %cst_77 {dimension_numbers = #tpu.dot_dimension_numbers<[1], [0], [0], [1], [0, 0, 1, 1], [], []>} : vector<16x8xf32>, vector<8x32xf32>, vector<16x32xf32> -> vector<16x32xf32>
    %101 = arith.addf %71, %100 : vector<16x32xf32>
    %c3 = arith.constant 3 : index
    %c0_78 = arith.constant 0 : index
    %c0_79 = arith.constant 0 : index
    %102 = vector.load %arg6[%c3, %c0_78, %c0_79] : memref<4x32x8xf32, #tpu.memory_space<vmem>>, vector<1x32x8xf32>
    %103 = vector.shape_cast %102 : vector<1x32x8xf32> to vector<32x8xf32>
    %cst_80 = arith.constant dense<0.000000e+00> : vector<16x8xf32>
    %104 = tpu.matmul %1, %103, %cst_80 {dimension_numbers = #tpu.dot_dimension_numbers<[1], [0], [0], [1], [0, 0, 1, 1], [], []>} : vector<16x32xf32>, vector<32x8xf32>, vector<16x8xf32> -> vector<16x8xf32>
    %c3_81 = arith.constant 3 : index
    %c0_82 = arith.constant 0 : index
    %c0_83 = arith.constant 0 : index
    %105 = vector.load %arg7[%c3_81, %c0_82, %c0_83] : memref<4x1x8xf32, #tpu.memory_space<vmem>>, vector<1x1x8xf32>
    %106 = vector.shape_cast %105 : vector<1x1x8xf32> to vector<1x8xf32>
    %107 = vector.broadcast %106 : vector<1x8xf32> to vector<16x8xf32>
    %108 = arith.addf %104, %107 : vector<16x8xf32>
    %cst_84 = arith.constant 0.353553385 : f32
    %109 = vector.broadcast %cst_84 : f32 to vector<16x8xf32>
    %110 = arith.mulf %108, %109 : vector<16x8xf32>
    %c0_85 = arith.constant 0 : index
    %c3_86 = arith.constant 3 : index
    %c0_87 = arith.constant 0 : index
    %c0_88 = arith.constant 0 : index
    %111 = vector.load %arg4[%c0_85, %c3_86, %c0_87, %c0_88] : memref<1x4x8x16xf32, #tpu.memory_space<vmem>>, vector<1x1x8x16xf32>
    %112 = vector.shape_cast %111 : vector<1x1x8x16xf32> to vector<8x16xf32>
    %cst_89 = arith.constant dense<0.000000e+00> : vector<16x16xf32>
    %113 = tpu.matmul %110, %112, %cst_89 {dimension_numbers = #tpu.dot_dimension_numbers<[1], [0], [0], [1], [0, 0, 1, 1], [], []>} : vector<16x8xf32>, vector<8x16xf32>, vector<16x16xf32> -> vector<16x16xf32>
    %114 = arith.addf %113, %10 : vector<16x16xf32>
    %cst_90 = arith.constant dense<0xFF800000> : vector<16xf32>
    %115 = vector.multi_reduction <maximumf>, %114, %cst_90 [1] : vector<16x16xf32> to vector<16xf32>
    %116 = vector.shape_cast %115 : vector<16xf32> to vector<16x1xf32>
    %117 = vector.broadcast %116 : vector<16x1xf32> to vector<16x16xf32>
    %118 = arith.subf %114, %117 : vector<16x16xf32>
    %119 = math.exp %118 : vector<16x16xf32>
    %cst_91 = arith.constant dense<0.000000e+00> : vector<16xf32>
    %120 = vector.multi_reduction <add>, %119, %cst_91 [1] : vector<16x16xf32> to vector<16xf32>
    %121 = vector.shape_cast %120 : vector<16xf32> to vector<16x1xf32>
    %122 = tpu.reciprocal %121 : vector<16x1xf32> -> vector<16x1xf32>
    %123 = vector.broadcast %122 : vector<16x1xf32> to vector<16x16xf32>
    %124 = arith.mulf %119, %123 : vector<16x16xf32>
    %c0_92 = arith.constant 0 : index
    %c3_93 = arith.constant 3 : index
    %c0_94 = arith.constant 0 : index
    %c0_95 = arith.constant 0 : index
    %125 = vector.load %arg5[%c0_92, %c3_93, %c0_94, %c0_95] : memref<1x4x16x8xf32, #tpu.memory_space<vmem>>, vector<1x1x16x8xf32>
    %126 = vector.shape_cast %125 : vector<1x1x16x8xf32> to vector<16x8xf32>
    %cst_96 = arith.constant dense<0.000000e+00> : vector<16x8xf32>
    %127 = tpu.matmul %124, %126, %cst_96 {dimension_numbers = #tpu.dot_dimension_numbers<[1], [0], [0], [1], [0, 0, 1, 1], [], []>} : vector<16x16xf32>, vector<16x8xf32>, vector<16x8xf32> -> vector<16x8xf32>
    %c3_97 = arith.constant 3 : index
    %c0_98 = arith.constant 0 : index
    %c0_99 = arith.constant 0 : index
    %128 = vector.load %arg8[%c3_97, %c0_98, %c0_99] : memref<4x8x32xf32, #tpu.memory_space<vmem>>, vector<1x8x32xf32>
    %129 = vector.shape_cast %128 : vector<1x8x32xf32> to vector<8x32xf32>
    %cst_100 = arith.constant dense<0.000000e+00> : vector<16x32xf32>
    %130 = tpu.matmul %127, %129, %cst_100 {dimension_numbers = #tpu.dot_dimension_numbers<[1], [0], [0], [1], [0, 0, 1, 1], [], []>} : vector<16x8xf32>, vector<8x32xf32>, vector<16x32xf32> -> vector<16x32xf32>
    %131 = arith.addf %101, %130 : vector<16x32xf32>
    %c0_101 = arith.constant 0 : index
    %c0_102 = arith.constant 0 : index
    %132 = vector.load %arg9[%c0_101, %c0_102] : memref<1x32xf32, #tpu.memory_space<vmem>>, vector<1x32xf32>
    %133 = vector.broadcast %132 : vector<1x32xf32> to vector<16x32xf32>
    %134 = arith.addf %131, %133 : vector<16x32xf32>
    %c0_103 = arith.constant 0 : index
    %c0_104 = arith.constant 0 : index
    %135 = vector.load %arg10[%c0_103, %c0_104] : memref<1x32xf32, #tpu.memory_space<vmem>>, vector<1x32xf32>
    %c0_105 = arith.constant 0 : index
    %c0_106 = arith.constant 0 : index
    %136 = vector.load %arg11[%c0_105, %c0_106] : memref<1x32xf32, #tpu.memory_space<vmem>>, vector<1x32xf32>
    %137 = arith.addf %1, %134 : vector<16x32xf32>
    %cst_107 = arith.constant dense<0.000000e+00> : vector<16xf32>
    %138 = vector.multi_reduction <add>, %137, %cst_107 [1] : vector<16x32xf32> to vector<16xf32>
    %139 = vector.shape_cast %138 : vector<16xf32> to vector<16x1xf32>
    %cst_108 = arith.constant 3.200000e+01 : f32
    %140 = vector.broadcast %cst_108 : f32 to vector<16x1xf32>
    %141 = arith.divf %139, %140 : vector<16x1xf32>
    %142 = vector.broadcast %141 : vector<16x1xf32> to vector<16x32xf32>
    %143 = arith.subf %137, %142 : vector<16x32xf32>
    %144 = arith.mulf %143, %143 : vector<16x32xf32>
    %cst_109 = arith.constant dense<0.000000e+00> : vector<16xf32>
    %145 = vector.multi_reduction <add>, %144, %cst_109 [1] : vector<16x32xf32> to vector<16xf32>
    %146 = vector.shape_cast %145 : vector<16xf32> to vector<16x1xf32>
    %cst_110 = arith.constant 3.200000e+01 : f32
    %147 = vector.broadcast %cst_110 : f32 to vector<16x1xf32>
    %148 = arith.divf %146, %147 : vector<16x1xf32>
    %149 = vector.broadcast %141 : vector<16x1xf32> to vector<16x32xf32>
    %150 = arith.subf %137, %149 : vector<16x32xf32>
    %cst_111 = arith.constant 9.99999974E-6 : f32
    %151 = vector.broadcast %cst_111 : f32 to vector<16x1xf32>
    %152 = arith.addf %148, %151 : vector<16x1xf32>
    %153 = math.rsqrt %152 : vector<16x1xf32>
    %154 = vector.broadcast %153 : vector<16x1xf32> to vector<16x32xf32>
    %155 = arith.mulf %150, %154 : vector<16x32xf32>
    %156 = vector.broadcast %135 : vector<1x32xf32> to vector<16x32xf32>
    %157 = arith.mulf %155, %156 : vector<16x32xf32>
    %158 = vector.broadcast %136 : vector<1x32xf32> to vector<16x32xf32>
    %159 = arith.addf %157, %158 : vector<16x32xf32>
    %c0_112 = arith.constant 0 : index
    %c0_113 = arith.constant 0 : index
    %160 = vector.load %arg12[%c0_112, %c0_113] : memref<32x64xf32, #tpu.memory_space<vmem>>, vector<32x64xf32>
    %cst_114 = arith.constant dense<0.000000e+00> : vector<16x64xf32>
    %161 = tpu.matmul %159, %160, %cst_114 {dimension_numbers = #tpu.dot_dimension_numbers<[1], [0], [0], [1], [0, 0, 1, 1], [], []>} : vector<16x32xf32>, vector<32x64xf32>, vector<16x64xf32> -> vector<16x64xf32>
    %c0_115 = arith.constant 0 : index
    %c0_116 = arith.constant 0 : index
    %162 = vector.load %arg13[%c0_115, %c0_116] : memref<1x64xf32, #tpu.memory_space<vmem>>, vector<1x64xf32>
    %163 = vector.broadcast %162 : vector<1x64xf32> to vector<16x64xf32>
    %164 = arith.addf %161, %163 : vector<16x64xf32>
    %cst_117 = arith.constant 0.000000e+00 : f32
    %165 = vector.broadcast %cst_117 : f32 to vector<16x64xf32>
    %166 = arith.maximumf %164, %165 : vector<16x64xf32>
    %c0_118 = arith.constant 0 : index
    %c0_119 = arith.constant 0 : index
    %167 = vector.load %arg14[%c0_118, %c0_119] : memref<64x32xf32, #tpu.memory_space<vmem>>, vector<64x32xf32>
    %cst_120 = arith.constant dense<0.000000e+00> : vector<16x32xf32>
    %168 = tpu.matmul %166, %167, %cst_120 {dimension_numbers = #tpu.dot_dimension_numbers<[1], [0], [0], [1], [0, 0, 1, 1], [], []>} : vector<16x64xf32>, vector<64x32xf32>, vector<16x32xf32> -> vector<16x32xf32>
    %c0_121 = arith.constant 0 : index
    %c0_122 = arith.constant 0 : index
    %169 = vector.load %arg15[%c0_121, %c0_122] : memref<1x32xf32, #tpu.memory_space<vmem>>, vector<1x32xf32>
    %170 = vector.broadcast %169 : vector<1x32xf32> to vector<16x32xf32>
    %171 = arith.addf %168, %170 : vector<16x32xf32>
    %172 = arith.addf %159, %171 : vector<16x32xf32>
    %cst_123 = arith.constant dense<0.000000e+00> : vector<16xf32>
    %173 = vector.multi_reduction <add>, %172, %cst_123 [1] : vector<16x32xf32> to vector<16xf32>
    %174 = vector.shape_cast %173 : vector<16xf32> to vector<16x1xf32>
    %cst_124 = arith.constant 3.200000e+01 : f32
    %175 = vector.broadcast %cst_124 : f32 to vector<16x1xf32>
    %176 = arith.divf %174, %175 : vector<16x1xf32>
    %177 = vector.broadcast %176 : vector<16x1xf32> to vector<16x32xf32>
    %178 = arith.subf %172, %177 : vector<16x32xf32>
    %179 = arith.mulf %178, %178 : vector<16x32xf32>
    %cst_125 = arith.constant dense<0.000000e+00> : vector<16xf32>
    %180 = vector.multi_reduction <add>, %179, %cst_125 [1] : vector<16x32xf32> to vector<16xf32>
    %181 = vector.shape_cast %180 : vector<16xf32> to vector<16x1xf32>
    %cst_126 = arith.constant 3.200000e+01 : f32
    %182 = vector.broadcast %cst_126 : f32 to vector<16x1xf32>
    %183 = arith.divf %181, %182 : vector<16x1xf32>
    %184 = vector.broadcast %176 : vector<16x1xf32> to vector<16x32xf32>
    %185 = arith.subf %172, %184 : vector<16x32xf32>
    %cst_127 = arith.constant 9.99999974E-6 : f32
    %186 = vector.broadcast %cst_127 : f32 to vector<16x1xf32>
    %187 = arith.addf %183, %186 : vector<16x1xf32>
    %188 = math.rsqrt %187 : vector<16x1xf32>
    %189 = vector.broadcast %188 : vector<16x1xf32> to vector<16x32xf32>
    %190 = arith.mulf %185, %189 : vector<16x32xf32>
    %191 = vector.broadcast %135 : vector<1x32xf32> to vector<16x32xf32>
    %192 = arith.mulf %190, %191 : vector<16x32xf32>
    %193 = vector.broadcast %136 : vector<1x32xf32> to vector<16x32xf32>
    %194 = arith.addf %192, %193 : vector<16x32xf32>
    %c0_128 = arith.constant 0 : index
    %c0_129 = arith.constant 0 : index
    %c0_130 = arith.constant 0 : index
    %195 = vector.load %arg16[%c0_128, %c0_129, %c0_130] : memref<1x16x32xf32, #tpu.memory_space<vmem>>, vector<1x16x32xf32>
    %196 = vector.shape_cast %195 : vector<1x16x32xf32> to vector<16x32xf32>
    %197 = vector.shape_cast %194 : vector<16x32xf32> to vector<1x16x32xf32>
    tpu.vector_store %arg16[%c0_128, %c0_129, %c0_130], %197 {strides = array<i32>} : memref<1x16x32xf32, #tpu.memory_space<vmem>>, vector<1x16x32xf32>,
    return
  }
  func.func @transform_0(%arg0: i32, %arg1: i32) -> (i32, i32, i32) {
    %c0_i32 = arith.constant 0 : i32
    %c0_i32_0 = arith.constant 0 : i32
    return %arg0, %arg1, %c0_i32 : i32, i32, i32
  }
  func.func @transform_1(%arg0: i32, %arg1: i32) -> (i32, i32, i32) {
    %c0_i32 = arith.constant 0 : i32
    %c0_i32_0 = arith.constant 0 : i32
    %c0_i32_1 = arith.constant 0 : i32
    return %arg0, %c0_i32, %c0_i32_0 : i32, i32, i32
  }
  func.func @transform_2(%arg0: i32, %arg1: i32) -> (i32, i32, i32, i32) {
    %c0_i32 = arith.constant 0 : i32
    %c0_i32_0 = arith.constant 0 : i32
    %c0_i32_1 = arith.constant 0 : i32
    %c0_i32_2 = arith.constant 0 : i32
    return %arg0, %c0_i32, %c0_i32_0, %c0_i32_1 : i32, i32, i32, i32
  }
  func.func @transform_3(%arg0: i32, %arg1: i32) -> (i32, i32, i32, i32) {
    %c0_i32 = arith.constant 0 : i32
    %c0_i32_0 = arith.constant 0 : i32
    %c0_i32_1 = arith.constant 0 : i32
    %c0_i32_2 = arith.constant 0 : i32
    return %arg0, %c0_i32, %c0_i32_0, %c0_i32_1 : i32, i32, i32, i32
  }
  func.func @transform_4(%arg0: i32, %arg1: i32) -> (i32, i32, i32) {
    %c0_i32 = arith.constant 0 : i32
    %c0_i32_0 = arith.constant 0 : i32
    %c0_i32_1 = arith.constant 0 : i32
    %c0_i32_2 = arith.constant 0 : i32
    return %c0_i32, %c0_i32_0, %c0_i32_1 : i32, i32, i32
  }
  func.func @transform_5(%arg0: i32, %arg1: i32) -> (i32, i32, i32) {
    %c0_i32 = arith.constant 0 : i32
    %c0_i32_0 = arith.constant 0 : i32
    %c0_i32_1 = arith.constant 0 : i32
    %c0_i32_2 = arith.constant 0 : i32
    return %c0_i32, %c0_i32_0, %c0_i32_1 : i32, i32, i32
  }
  func.func @transform_6(%arg0: i32, %arg1: i32) -> (i32, i32, i32) {
    %c0_i32 = arith.constant 0 : i32
    %c0_i32_0 = arith.constant 0 : i32
    %c0_i32_1 = arith.constant 0 : i32
    %c0_i32_2 = arith.constant 0 : i32
    return %c0_i32, %c0_i32_0, %c0_i32_1 : i32, i32, i32
  }
  func.func @transform_7(%arg0: i32, %arg1: i32) -> (i32, i32) {
    %c0_i32 = arith.constant 0 : i32
    %c0_i32_0 = arith.constant 0 : i32
    %c0_i32_1 = arith.constant 0 : i32
    return %c0_i32, %c0_i32_0 : i32, i32
  }
  func.func @transform_8(%arg0: i32, %arg1: i32) -> (i32, i32) {
    %c0_i32 = arith.constant 0 : i32
    %c0_i32_0 = arith.constant 0 : i32
    %c0_i32_1 = arith.constant 0 : i32
    return %c0_i32, %c0_i32_0 : i32, i32
  }
  func.func @transform_9(%arg0: i32, %arg1: i32) -> (i32, i32) {
    %c0_i32 = arith.constant 0 : i32
    %c0_i32_0 = arith.constant 0 : i32
    %c0_i32_1 = arith.constant 0 : i32
    return %c0_i32, %c0_i32_0 : i32, i32
  }
  func.func @transform_10(%arg0: i32, %arg1: i32) -> (i32, i32) {
    %c0_i32 = arith.constant 0 : i32
    %c0_i32_0 = arith.constant 0 : i32
    %c0_i32_1 = arith.constant 0 : i32
    return %c0_i32, %c0_i32_0 : i32, i32
  }
  func.func @transform_11(%arg0: i32, %arg1: i32) -> (i32, i32) {
    %c0_i32 = arith.constant 0 : i32
    %c0_i32_0 = arith.constant 0 : i32
    %c0_i32_1 = arith.constant 0 : i32
    return %c0_i32, %c0_i32_0 : i32, i32
  }
  func.func @transform_12(%arg0: i32, %arg1: i32) -> (i32, i32) {
    %c0_i32 = arith.constant 0 : i32
    %c0_i32_0 = arith.constant 0 : i32
    %c0_i32_1 = arith.constant 0 : i32
    return %c0_i32, %c0_i32_0 : i32, i32
  }
  func.func @transform_13(%arg0: i32, %arg1: i32) -> (i32, i32) {
    %c0_i32 = arith.constant 0 : i32
    %c0_i32_0 = arith.constant 0 : i32
    %c0_i32_1 = arith.constant 0 : i32
    return %c0_i32, %c0_i32_0 : i32, i32
  }
  func.func @transform_14(%arg0: i32, %arg1: i32) -> (i32, i32, i32) {
    %c0_i32 = arith.constant 0 : i32
    %c0_i32_0 = arith.constant 0 : i32
    return %arg0, %arg1, %c0_i32 : i32, i32, i32
  }
}

</mosaic_0001>

<llo_original>
// kernel: tpu_custom_call.1
$region0: #{tpu_custom_call.1}
  #allocation0 [shape = 'u32[]', space=smem, size = 0x4, offset = 0x4, fixed_abs, tag = 'smem constant byte address 0x4 - core index']
  #allocation1 [shape = 'u32[144,128]{1,0:T(1,128)}', space=vmem, size = 0x12000, scoped, tag = 'internal scratch']
  %s0 = inlined_call_operand.vmem [shape: f32[2,16,32], index: 0, kind: input, shape index: {}]
  %s1 = inlined_call_operand.vmem [shape: f32[2,1,16], index: 1, kind: input, shape index: {}]
  %s2 = inlined_call_operand.vmem [shape: f32[2,4,8,16], index: 2, kind: input, shape index: {}]
  %s3 = inlined_call_operand.vmem [shape: f32[2,4,16,8], index: 3, kind: input, shape index: {}]
  %s4 = inlined_call_operand.vmem [shape: f32[4,32,8], index: 4, kind: input, shape index: {}]
  %s5 = inlined_call_operand.vmem [shape: f32[4,1,8], index: 5, kind: input, shape index: {}]
  %s6 = inlined_call_operand.vmem [shape: f32[4,8,32], index: 6, kind: input, shape index: {}]
  %s7 = inlined_call_operand.vmem [shape: f32[1,32], index: 7, kind: input, shape index: {}]
  %s8 = inlined_call_operand.vmem [shape: f32[1,32], index: 8, kind: input, shape index: {}]
  %s9 = inlined_call_operand.vmem [shape: f32[1,32], index: 9, kind: input, shape index: {}]
  %s10 = inlined_call_operand.vmem [shape: f32[32,64], index: 10, kind: input, shape index: {}]
  %s11 = inlined_call_operand.vmem [shape: f32[1,64], index: 11, kind: input, shape index: {}]
  %s12 = inlined_call_operand.vmem [shape: f32[64,32], index: 12, kind: input, shape index: {}]
  %s13 = inlined_call_operand.vmem [shape: f32[1,32], index: 13, kind: input, shape index: {}]
  %s14 = inlined_call_operand.hbm [shape: f32[2,16,32], index: 14, kind: output, shape index: {}]
  %s15 = sld [smem:[#allocation0]]
  $region89: #{tpu_custom_call.1} parent=0
    _
  %s17 = ssub.s32 1, %s15
  %s18 = scalar_select 0, %s17, %s15
  $region1: #{tpu_custom_call.1} parent=0
    #allocation2 [shape = 'u8[16384]{0}', space=vmem, size = 0x4000, scoped, tag = 'output window, operand 0']
    #allocation3 [shape = 's32[2]{0}', space=sflag, size = 0x8, scoped, tag = 'scoped memory for tpu_custom_call.1']
    %19 = vsyncpa [#allocation3], 0
    %s20 = scalar_lea.sflag [#allocation3], 1
    %21 = vsyncpa %s20, 0
    loop: start=0, step=1, limit=4
    $region2: #{tpu_custom_call.1} parent=1 // loop_pre_header
      _
    $region3: #{tpu_custom_call.1} parent=1 // loop_header
      %s23 = sphi 0, %s27
      %p24 = scmp.ge.s32.totalorder %s23, 4
      %s30 = sphi 0, %s42
      %s31 = sphi 0, %s38
      %s32 = sphi 0, %s30
      %s33 = sphi 0, %s31
      %s34 = sphi 0, %s32
      %s35 = sphi 0, %s33
      %s47 = sphi 0, %s49
      %s50 = sphi 0, %s47
      %s51 = sphi 0, %s50
      %s67 = sphi 0, %s51
      %s73 = sphi 0, %s75
      %s76 = sphi 0, %s73
      %s77 = sphi 0, %s76
      %s93 = sphi 0, %s77
      %s99 = sphi 0, %s101
      %s102 = sphi 0, %s99
      %s103 = sphi 0, %s102
      %s119 = sphi 0, %s103
      %s125 = sphi 0, %s127
      %s128 = sphi 0, %s125
      %s129 = sphi 0, %s128
      %s145 = sphi 0, %s129
      %s149 = sphi 0, %s149
      %s151 = sphi 0, %s149
      %s152 = sphi 0, %s151
      %s166 = sphi 0, %s152
      %s170 = sphi 0, %s170
      %s172 = sphi 0, %s170
      %s173 = sphi 0, %s172
      %s187 = sphi 0, %s173
      %s191 = sphi 0, %s191
      %s193 = sphi 0, %s191
      %s194 = sphi 0, %s193
      %s208 = sphi 0, %s194
      %s212 = sphi 0, %s212
      %s214 = sphi 0, %s212
      %s215 = sphi 0, %s214
      %s229 = sphi 0, %s215
      %s233 = sphi 0, %s233
      %s235 = sphi 0, %s233
      %s236 = sphi 0, %s235
      %s250 = sphi 0, %s236
      %s254 = sphi 0, %s254
      %s256 = sphi 0, %s254
      %s257 = sphi 0, %s256
      %s271 = sphi 0, %s257
      %s275 = sphi 0, %s275
      %s277 = sphi 0, %s275
      %s278 = sphi 0, %s277
      %s292 = sphi 0, %s278
      %s296 = sphi 0, %s296
      %s298 = sphi 0, %s296
      %s299 = sphi 0, %s298
      %s313 = sphi 0, %s299
      %s317 = sphi 0, %s317
      %s319 = sphi 0, %s317
      %s320 = sphi 0, %s319
      %s334 = sphi 0, %s320
      %s338 = sphi 0, %s338
      %s340 = sphi 0, %s338
      %s341 = sphi 0, %s340
      %s355 = sphi 0, %s341
      %s363 = sphi 0, %s365
      %s366 = sphi 0, %s363
      %s367 = sphi 0, %s366
      %s383 = sphi 0, %s367
    $region4: #{tpu_custom_call.1} parent=1 // loop_header_branch
      %26 = sbr.rel (%p24) target = $region8
    $region5: #{tpu_custom_call.1} parent=1 // loop_body
      %s28 = ssub.s32 %s23, 1
      %s29 = ssub.s32 %s23, 2
      %s36 = sadd.s32 1, %s31
      %p37 = scmp.ge.s32.totalorder %s36, 1
      %s38 = scalar_select %p37, 0, %s36
      %s39 = sadd.s32 1, %s30
      %s40 = scalar_select %p37, %s39, %s30
      %p41 = scmp.ge.s32.totalorder %s40, 2
      %s42 = scalar_select %p41, 0, %s40
      %s43 = ssub.s32 %s30, %s42
      %s44 = ssub.s32 %s31, %s38
      %s45 = sor.u32 %s43, %s44
      %p46 = scmp.eq.s32.totalorder %s45, 0
      %s48 = sadd.s32 %s47, 1
      %s49 = scalar_select %p46, %s47, %s48
      %p52 = pneg %p46
      %p53 = scmp.eq.s32.totalorder %s23, 1
      %p54 = por %p52, %p53
      %p55 = scmp.ne.s32.totalorder %s47, %s50
      %p56 = scmp.eq.s32.totalorder %s23, 0
      %p57 = por %p55, %p56
      %p58 = scmp.ne.s32.totalorder %s47, %s50
      %p59 = scmp.eq.s32.totalorder %s28, 1
      %p60 = por %p58, %p59
      %p61 = scmp.ne.s32.totalorder %s50, %s51
      %p62 = scmp.eq.s32.totalorder %s28, 0
      %p63 = por %p61, %p62
      %p64 = scmp.ne.s32.totalorder %s50, %s51
      %p65 = scmp.eq.s32.totalorder %s29, 1
      %p66 = por %p64, %p65
      %p68 = scmp.ne.s32.totalorder %s51, %s67
      %p69 = scmp.eq.s32.totalorder %s29, 0
      %p70 = por %p68, %p69
      %s71 = ssub.s32 %s30, %s42
      %p72 = scmp.eq.s32.totalorder %s71, 0
      %s74 = sadd.s32 %s73, 1
      %s75 = scalar_select %p72, %s73, %s74
      %p78 = pneg %p72
      %p79 = scmp.eq.s32.totalorder %s23, 1
      %p80 = por %p78, %p79
      %p81 = scmp.ne.s32.totalorder %s73, %s76
      %p82 = scmp.eq.s32.totalorder %s23, 0
      %p83 = por %p81, %p82
      %p84 = scmp.ne.s32.totalorder %s73, %s76
      %p85 = scmp.eq.s32.totalorder %s28, 1
      %p86 = por %p84, %p85
      %p87 = scmp.ne.s32.totalorder %s76, %s77
      %p88 = scmp.eq.s32.totalorder %s28, 0
      %p89 = por %p87, %p88
      %p90 = scmp.ne.s32.totalorder %s76, %s77
      %p91 = scmp.eq.s32.totalorder %s29, 1
      %p92 = por %p90, %p91
      %p94 = scmp.ne.s32.totalorder %s77, %s93
      %p95 = scmp.eq.s32.totalorder %s29, 0
      %p96 = por %p94, %p95
      %s97 = ssub.s32 %s30, %s42
      %p98 = scmp.eq.s32.totalorder %s97, 0
      %s100 = sadd.s32 %s99, 1
      %s101 = scalar_select %p98, %s99, %s100
      %p104 = pneg %p98
      %p105 = scmp.eq.s32.totalorder %s23, 1
      %p106 = por %p104, %p105
      %p107 = scmp.ne.s32.totalorder %s99, %s102
      %p108 = scmp.eq.s32.totalorder %s23, 0
      %p109 = por %p107, %p108
      %p110 = scmp.ne.s32.totalorder %s99, %s102
      %p111 = scmp.eq.s32.totalorder %s28, 1
      %p112 = por %p110, %p111
      %p113 = scmp.ne.s32.totalorder %s102, %s103
      %p114 = scmp.eq.s32.totalorder %s28, 0
      %p115 = por %p113, %p114
      %p116 = scmp.ne.s32.totalorder %s102, %s103
      %p117 = scmp.eq.s32.totalorder %s29, 1
      %p118 = por %p116, %p117
      %p120 = scmp.ne.s32.totalorder %s103, %s119
      %p121 = scmp.eq.s32.totalorder %s29, 0
      %p122 = por %p120, %p121
      %s123 = ssub.s32 %s30, %s42
      %p124 = scmp.eq.s32.totalorder %s123, 0
      %s126 = sadd.s32 %s125, 1
      %s127 = scalar_select %p124, %s125, %s126
      %p130 = pneg %p124
      %p131 = scmp.eq.s32.totalorder %s23, 1
      %p132 = por %p130, %p131
      %p133 = scmp.ne.s32.totalorder %s125, %s128
      %p134 = scmp.eq.s32.totalorder %s23, 0
      %p135 = por %p133, %p134
      %p136 = scmp.ne.s32.totalorder %s125, %s128
      %p137 = scmp.eq.s32.totalorder %s28, 1
      %p138 = por %p136, %p137
      %p139 = scmp.ne.s32.totalorder %s128, %s129
      %p140 = scmp.eq.s32.totalorder %s28, 0
      %p141 = por %p139, %p140
      %p142 = scmp.ne.s32.totalorder %s128, %s129
      %p143 = scmp.eq.s32.totalorder %s29, 1
      %p144 = por %p142, %p143
      %p146 = scmp.ne.s32.totalorder %s129, %s145
      %p147 = scmp.eq.s32.totalorder %s29, 0
      %p148 = por %p146, %p147
      %s150 = sadd.s32 %s149, 1
      %p153 = scmp.eq.s32.totalorder %s23, 1
      %p154 = scmp.ne.s32.totalorder %s149, %s151
      %p155 = scmp.eq.s32.totalorder %s23, 0
      %p156 = por %p154, %p155
      %p157 = scmp.ne.s32.totalorder %s149, %s151
      %p158 = scmp.eq.s32.totalorder %s28, 1
      %p159 = por %p157, %p158
      %p160 = scmp.ne.s32.totalorder %s151, %s152
      %p161 = scmp.eq.s32.totalorder %s28, 0
      %p162 = por %p160, %p161
      %p163 = scmp.ne.s32.totalorder %s151, %s152
      %p164 = scmp.eq.s32.totalorder %s29, 1
      %p165 = por %p163, %p164
      %p167 = scmp.ne.s32.totalorder %s152, %s166
      %p168 = scmp.eq.s32.totalorder %s29, 0
      %p169 = por %p167, %p168
      %s171 = sadd.s32 %s170, 1
      %p174 = scmp.eq.s32.totalorder %s23, 1
      %p175 = scmp.ne.s32.totalorder %s170, %s172
      %p176 = scmp.eq.s32.totalorder %s23, 0
      %p177 = por %p175, %p176
      %p178 = scmp.ne.s32.totalorder %s170, %s172
      %p179 = scmp.eq.s32.totalorder %s28, 1
      %p180 = por %p178, %p179
      %p181 = scmp.ne.s32.totalorder %s172, %s173
      %p182 = scmp.eq.s32.totalorder %s28, 0
      %p183 = por %p181, %p182
      %p184 = scmp.ne.s32.totalorder %s172, %s173
      %p185 = scmp.eq.s32.totalorder %s29, 1
      %p186 = por %p184, %p185
      %p188 = scmp.ne.s32.totalorder %s173, %s187
      %p189 = scmp.eq.s32.totalorder %s29, 0
      %p190 = por %p188, %p189
      %s192 = sadd.s32 %s191, 1
      %p195 = scmp.eq.s32.totalorder %s23, 1
      %p196 = scmp.ne.s32.totalorder %s191, %s193
      %p197 = scmp.eq.s32.totalorder %s23, 0
      %p198 = por %p196, %p197
      %p199 = scmp.ne.s32.totalorder %s191, %s193
      %p200 = scmp.eq.s32.totalorder %s28, 1
      %p201 = por %p199, %p200
      %p202 = scmp.ne.s32.totalorder %s193, %s194
      %p203 = scmp.eq.s32.totalorder %s28, 0
      %p204 = por %p202, %p203
      %p205 = scmp.ne.s32.totalorder %s193, %s194
      %p206 = scmp.eq.s32.totalorder %s29, 1
      %p207 = por %p205, %p206
      %p209 = scmp.ne.s32.totalorder %s194, %s208
      %p210 = scmp.eq.s32.totalorder %s29, 0
      %p211 = por %p209, %p210
      %s213 = sadd.s32 %s212, 1
      %p216 = scmp.eq.s32.totalorder %s23, 1
      %p217 = scmp.ne.s32.totalorder %s212, %s214
      %p218 = scmp.eq.s32.totalorder %s23, 0
      %p219 = por %p217, %p218
      %p220 = scmp.ne.s32.totalorder %s212, %s214
      %p221 = scmp.eq.s32.totalorder %s28, 1
      %p222 = por %p220, %p221
      %p223 = scmp.ne.s32.totalorder %s214, %s215
      %p224 = scmp.eq.s32.totalorder %s28, 0
      %p225 = por %p223, %p224
      %p226 = scmp.ne.s32.totalorder %s214, %s215
      %p227 = scmp.eq.s32.totalorder %s29, 1
      %p228 = por %p226, %p227
      %p230 = scmp.ne.s32.totalorder %s215, %s229
      %p231 = scmp.eq.s32.totalorder %s29, 0
      %p232 = por %p230, %p231
      %s234 = sadd.s32 %s233, 1
      %p237 = scmp.eq.s32.totalorder %s23, 1
      %p238 = scmp.ne.s32.totalorder %s233, %s235
      %p239 = scmp.eq.s32.totalorder %s23, 0
      %p240 = por %p238, %p239
      %p241 = scmp.ne.s32.totalorder %s233, %s235
      %p242 = scmp.eq.s32.totalorder %s28, 1
      %p243 = por %p241, %p242
      %p244 = scmp.ne.s32.totalorder %s235, %s236
      %p245 = scmp.eq.s32.totalorder %s28, 0
      %p246 = por %p244, %p245
      %p247 = scmp.ne.s32.totalorder %s235, %s236
      %p248 = scmp.eq.s32.totalorder %s29, 1
      %p249 = por %p247, %p248
      %p251 = scmp.ne.s32.totalorder %s236, %s250
      %p252 = scmp.eq.s32.totalorder %s29, 0
      %p253 = por %p251, %p252
      %s255 = sadd.s32 %s254, 1
      %p258 = scmp.eq.s32.totalorder %s23, 1
      %p259 = scmp.ne.s32.totalorder %s254, %s256
      %p260 = scmp.eq.s32.totalorder %s23, 0
      %p261 = por %p259, %p260
      %p262 = scmp.ne.s32.totalorder %s254, %s256
      %p263 = scmp.eq.s32.totalorder %s28, 1
      %p264 = por %p262, %p263
      %p265 = scmp.ne.s32.totalorder %s256, %s257
      %p266 = scmp.eq.s32.totalorder %s28, 0
      %p267 = por %p265, %p266
      %p268 = scmp.ne.s32.totalorder %s256, %s257
      %p269 = scmp.eq.s32.totalorder %s29, 1
      %p270 = por %p268, %p269
      %p272 = scmp.ne.s32.totalorder %s257, %s271
      %p273 = scmp.eq.s32.totalorder %s29, 0
      %p274 = por %p272, %p273
      %s276 = sadd.s32 %s275, 1
      %p279 = scmp.eq.s32.totalorder %s23, 1
      %p280 = scmp.ne.s32.totalorder %s275, %s277
      %p281 = scmp.eq.s32.totalorder %s23, 0
      %p282 = por %p280, %p281
      %p283 = scmp.ne.s32.totalorder %s275, %s277
      %p284 = scmp.eq.s32.totalorder %s28, 1
      %p285 = por %p283, %p284
      %p286 = scmp.ne.s32.totalorder %s277, %s278
      %p287 = scmp.eq.s32.totalorder %s28, 0
      %p288 = por %p286, %p287
      %p289 = scmp.ne.s32.totalorder %s277, %s278
      %p290 = scmp.eq.s32.totalorder %s29, 1
      %p291 = por %p289, %p290
      %p293 = scmp.ne.s32.totalorder %s278, %s292
      %p294 = scmp.eq.s32.totalorder %s29, 0
      %p295 = por %p293, %p294
      %s297 = sadd.s32 %s296, 1
      %p300 = scmp.eq.s32.totalorder %s23, 1
      %p301 = scmp.ne.s32.totalorder %s296, %s298
      %p302 = scmp.eq.s32.totalorder %s23, 0
      %p303 = por %p301, %p302
      %p304 = scmp.ne.s32.totalorder %s296, %s298
      %p305 = scmp.eq.s32.totalorder %s28, 1
      %p306 = por %p304, %p305
      %p307 = scmp.ne.s32.totalorder %s298, %s299
      %p308 = scmp.eq.s32.totalorder %s28, 0
      %p309 = por %p307, %p308
      %p310 = scmp.ne.s32.totalorder %s298, %s299
      %p311 = scmp.eq.s32.totalorder %s29, 1
      %p312 = por %p310, %p311
      %p314 = scmp.ne.s32.totalorder %s299, %s313
      %p315 = scmp.eq.s32.totalorder %s29, 0
      %p316 = por %p314, %p315
      %s318 = sadd.s32 %s317, 1
      %p321 = scmp.eq.s32.totalorder %s23, 1
      %p322 = scmp.ne.s32.totalorder %s317, %s319
      %p323 = scmp.eq.s32.totalorder %s23, 0
      %p324 = por %p322, %p323
      %p325 = scmp.ne.s32.totalorder %s317, %s319
      %p326 = scmp.eq.s32.totalorder %s28, 1
      %p327 = por %p325, %p326
      %p328 = scmp.ne.s32.totalorder %s319, %s320
      %p329 = scmp.eq.s32.totalorder %s28, 0
      %p330 = por %p328, %p329
      %p331 = scmp.ne.s32.totalorder %s319, %s320
      %p332 = scmp.eq.s32.totalorder %s29, 1
      %p333 = por %p331, %p332
      %p335 = scmp.ne.s32.totalorder %s320, %s334
      %p336 = scmp.eq.s32.totalorder %s29, 0
      %p337 = por %p335, %p336
      %s339 = sadd.s32 %s338, 1
      %p342 = scmp.eq.s32.totalorder %s23, 1
      %p343 = scmp.ne.s32.totalorder %s338, %s340
      %p344 = scmp.eq.s32.totalorder %s23, 0
      %p345 = por %p343, %p344
      %p346 = scmp.ne.s32.totalorder %s338, %s340
      %p347 = scmp.eq.s32.totalorder %s28, 1
      %p348 = por %p346, %p347
      %p349 = scmp.ne.s32.totalorder %s340, %s341
      %p350 = scmp.eq.s32.totalorder %s28, 0
      %p351 = por %p349, %p350
      %p352 = scmp.ne.s32.totalorder %s340, %s341
      %p353 = scmp.eq.s32.totalorder %s29, 1
      %p354 = por %p352, %p353
      %p356 = scmp.ne.s32.totalorder %s341, %s355
      %p357 = scmp.eq.s32.totalorder %s29, 0
      %p358 = por %p356, %p357
      %s359 = ssub.s32 %s30, %s42
      %s360 = ssub.s32 %s31, %s38
      %s361 = sor.u32 %s359, %s360
      %p362 = scmp.eq.s32.totalorder %s361, 0
      %s364 = sadd.s32 %s363, 1
      %s365 = scalar_select %p362, %s363, %s364
      %p368 = pneg %p362
      %p369 = scmp.eq.s32.totalorder %s23, 1
      %p370 = por %p368, %p369
      %p371 = scmp.ne.s32.totalorder %s363, %s366
      %p372 = scmp.eq.s32.totalorder %s23, 0
      %p373 = por %p371, %p372
      %p374 = scmp.ne.s32.totalorder %s363, %s366
      %p375 = scmp.eq.s32.totalorder %s28, 1
      %p376 = por %p374, %p375
      %p377 = scmp.ne.s32.totalorder %s366, %s367
      %p378 = scmp.eq.s32.totalorder %s28, 0
      %p379 = por %p377, %p378
      %p380 = scmp.ne.s32.totalorder %s366, %s367
      %p381 = scmp.eq.s32.totalorder %s29, 1
      %p382 = por %p380, %p381
      %p384 = scmp.ne.s32.totalorder %s367, %s383
      %p385 = scmp.eq.s32.totalorder %s29, 0
      %p386 = por %p384, %p385
      %p387 = scmp.le.s32.totalorder 1, %s23
      %p388 = scmp.lt.s32.totalorder %s23, 3
      %p389 = pnand %p387, %p388
      %p390 = pneg %p389
      // Predicated region
      $region9: #{tpu_custom_call.1} parent=5 // pred_check
        _
      $region10: #{tpu_custom_call.1} parent=5 // pred_check_branch
        %392 = sbr.rel (%p389) target = $region12
      $region11: #{tpu_custom_call.1} parent=5 // pred_region
        %s393 = ssub.s32 %s23, 1
        // Predicated region
        $region13: #{tpu_custom_call.1} parent=11 // pred_check
          %p394 = pneg %p162
        $region14: #{tpu_custom_call.1} parent=11 // pred_check_branch
          %396 = sbr.rel (%p394) target = $region16
        $region15: #{tpu_custom_call.1} parent=11 // pred_region
          _
        $region16: #{tpu_custom_call.1} parent=11 // pred_fallthru
          _
        // Predicated region
        $region17: #{tpu_custom_call.1} parent=11 // pred_check
          %p397 = pneg %p183
        $region18: #{tpu_custom_call.1} parent=11 // pred_check_branch
          %399 = sbr.rel (%p397) target = $region20
        $region19: #{tpu_custom_call.1} parent=11 // pred_region
          _
        $region20: #{tpu_custom_call.1} parent=11 // pred_fallthru
          _
        // Predicated region
        $region21: #{tpu_custom_call.1} parent=11 // pred_check
          %p400 = pneg %p204
        $region22: #{tpu_custom_call.1} parent=11 // pred_check_branch
          %402 = sbr.rel (%p400) target = $region24
        $region23: #{tpu_custom_call.1} parent=11 // pred_region
          _
        $region24: #{tpu_custom_call.1} parent=11 // pred_fallthru
          _
        // Predicated region
        $region25: #{tpu_custom_call.1} parent=11 // pred_check
          %p403 = pneg %p225
        $region26: #{tpu_custom_call.1} parent=11 // pred_check_branch
          %405 = sbr.rel (%p403) target = $region28
        $region27: #{tpu_custom_call.1} parent=11 // pred_region
          _
        $region28: #{tpu_custom_call.1} parent=11 // pred_fallthru
          _
        // Predicated region
        $region29: #{tpu_custom_call.1} parent=11 // pred_check
          %p406 = pneg %p246
        $region30: #{tpu_custom_call.1} parent=11 // pred_check_branch
          %408 = sbr.rel (%p406) target = $region32
        $region31: #{tpu_custom_call.1} parent=11 // pred_region
          _
        $region32: #{tpu_custom_call.1} parent=11 // pred_fallthru
          _
        // Predicated region
        $region33: #{tpu_custom_call.1} parent=11 // pred_check
          %p409 = pneg %p267
        $region34: #{tpu_custom_call.1} parent=11 // pred_check_branch
          %411 = sbr.rel (%p409) target = $region36
        $region35: #{tpu_custom_call.1} parent=11 // pred_region
          _
        $region36: #{tpu_custom_call.1} parent=11 // pred_fallthru
          _
        // Predicated region
        $region37: #{tpu_custom_call.1} parent=11 // pred_check
          %p412 = pneg %p288
        $region38: #{tpu_custom_call.1} parent=11 // pred_check_branch
          %414 = sbr.rel (%p412) target = $region40
        $region39: #{tpu_custom_call.1} parent=11 // pred_region
          _
        $region40: #{tpu_custom_call.1} parent=11 // pred_fallthru
          _
        // Predicated region
        $region41: #{tpu_custom_call.1} parent=11 // pred_check
          %p415 = pneg %p309
        $region42: #{tpu_custom_call.1} parent=11 // pred_check_branch
          %417 = sbr.rel (%p415) target = $region44
        $region43: #{tpu_custom_call.1} parent=11 // pred_region
          _
        $region44: #{tpu_custom_call.1} parent=11 // pred_fallthru
          _
        // Predicated region
        $region45: #{tpu_custom_call.1} parent=11 // pred_check
          %p418 = pneg %p330
        $region46: #{tpu_custom_call.1} parent=11 // pred_check_branch
          %420 = sbr.rel (%p418) target = $region48
        $region47: #{tpu_custom_call.1} parent=11 // pred_region
          _
        $region48: #{tpu_custom_call.1} parent=11 // pred_fallthru
          _
        // Predicated region
        $region49: #{tpu_custom_call.1} parent=11 // pred_check
          %p421 = pneg %p351
        $region50: #{tpu_custom_call.1} parent=11 // pred_check_branch
          %423 = sbr.rel (%p421) target = $region52
        $region51: #{tpu_custom_call.1} parent=11 // pred_region
          _
        $region52: #{tpu_custom_call.1} parent=11 // pred_fallthru
          _
      $region12: #{tpu_custom_call.1} parent=5 // pred_fallthru
        _
      %p424 = scmp.lt.s32.totalorder %s23, 2
      // Predicated region
      $region53: #{tpu_custom_call.1} parent=5 // pred_check
        %p425 = pneg %p424
      $region54: #{tpu_custom_call.1} parent=5 // pred_check_branch
        %427 = sbr.rel (%p425) target = $region56
      $region55: #{tpu_custom_call.1} parent=5 // pred_region
        // Predicated region
        $region57: #{tpu_custom_call.1} parent=55 // pred_check
          %p428 = pneg %p57
        $region58: #{tpu_custom_call.1} parent=55 // pred_check_branch
          %430 = sbr.rel (%p428) target = $region60
        $region59: #{tpu_custom_call.1} parent=55 // pred_region
          %s431 = smul.u32 2, %s31
          %p432 = scmp.lt.s32.totalorder %s30, 1
          %s433 = scalar_select %p432, %s30, 1
          %p434 = scmp.lt.s32.totalorder %s431, 1
          %s435 = scalar_select %p434, %s431, 1
          %s436 = smul.addr %s433, 2
          %s437 = sadd.s32 %s435, %s436
          %s438 = smul.addr %s437, 8
          %s439 = scalar_lea.vmem %s0, %s438
          %s440 = smul.u32 2, %s31
        $region60: #{tpu_custom_call.1} parent=55 // pred_fallthru
          _
        // Predicated region
        $region61: #{tpu_custom_call.1} parent=55 // pred_check
          %p441 = pneg %p83
        $region62: #{tpu_custom_call.1} parent=55 // pred_check_branch
          %443 = sbr.rel (%p441) target = $region64
        $region63: #{tpu_custom_call.1} parent=55 // pred_region
          %p444 = scmp.lt.s32.totalorder %s30, 1
          %s445 = scalar_select %p444, %s30, 1
          %s446 = scalar_lea.vmem %s1, %s445
        $region64: #{tpu_custom_call.1} parent=55 // pred_fallthru
          _
        // Predicated region
        $region65: #{tpu_custom_call.1} parent=55 // pred_check
          %p447 = pneg %p109
        $region66: #{tpu_custom_call.1} parent=55 // pred_check_branch
          %449 = sbr.rel (%p447) target = $region68
        $region67: #{tpu_custom_call.1} parent=55 // pred_region
          %p450 = scmp.lt.s32.totalorder %s30, 1
          %s451 = scalar_select %p450, %s30, 1
          %s452 = smul.addr %s451, 4
          %s453 = smul.addr %s452, 8
          %s454 = scalar_lea.vmem %s2, %s453
        $region68: #{tpu_custom_call.1} parent=55 // pred_fallthru
          _
        // Predicated region
        $region69: #{tpu_custom_call.1} parent=55 // pred_check
          %p455 = pneg %p135
        $region70: #{tpu_custom_call.1} parent=55 // pred_check_branch
          %457 = sbr.rel (%p455) target = $region72
        $region71: #{tpu_custom_call.1} parent=55 // pred_region
          %p458 = scmp.lt.s32.totalorder %s30, 1
          %s459 = scalar_select %p458, %s30, 1
          %s460 = smul.addr %s459, 8
          %s461 = smul.addr %s460, 8
          %s462 = scalar_lea.vmem %s3, %s461
        $region72: #{tpu_custom_call.1} parent=55 // pred_fallthru
          _
      $region56: #{tpu_custom_call.1} parent=5 // pred_fallthru
        _
      %p463 = scmp.le.s32.totalorder 1, %s23
      %p464 = scmp.lt.s32.totalorder %s23, 3
      %p465 = pnand %p463, %p464
      %p466 = pneg %p465
      // Predicated region
      $region73: #{tpu_custom_call.1} parent=5 // pred_check
        _
      $region74: #{tpu_custom_call.1} parent=5 // pred_check_branch
        %468 = sbr.rel (%p465) target = $region76
      $region75: #{tpu_custom_call.1} parent=5 // pred_region
        %s469 = ssub.s32 %s23, 1
        %s470 = smul.u32 2, %s33
        %p471 = scmp.lt.s32.totalorder %s32, 1
        %s472 = scalar_select %p471, %s32, 1
        %p473 = scmp.lt.s32.totalorder %s470, 1
        %s474 = scalar_select %p473, %s470, 1
        %s475 = smul.addr %s472, 2
        %s476 = sadd.s32 %s474, %s475
        %s477 = smul.addr %s476, 8
        %s478 = scalar_lea.vmem %s0, %s477
        %p479 = pneg %p63
        %p480 = pneg %p60
        %p481 = scmp.lt.s32.totalorder %s32, 1
        %s482 = scalar_select %p481, %s32, 1
        %s483 = scalar_lea.vmem %s1, %s482
        %p484 = pneg %p89
        %p485 = pneg %p86
        %p486 = scmp.lt.s32.totalorder %s32, 1
        %s487 = scalar_select %p486, %s32, 1
        %s488 = smul.addr %s487, 4
        %s489 = smul.addr %s488, 8
        %s490 = scalar_lea.vmem %s2, %s489
        %p491 = pneg %p115
        %p492 = pneg %p112
        %p493 = scmp.lt.s32.totalorder %s32, 1
        %s494 = scalar_select %p493, %s32, 1
        %s495 = smul.addr %s494, 8
        %s496 = smul.addr %s495, 8
        %s497 = scalar_lea.vmem %s3, %s496
        %p498 = pneg %p141
        %p499 = pneg %p138
        %p500 = pneg %p162
        %p501 = pneg %p159
        %p502 = pneg %p183
        %p503 = pneg %p180
        %p504 = pneg %p204
        %p505 = pneg %p201
        %p506 = pneg %p225
        %p507 = pneg %p222
        %p508 = pneg %p246
        %p509 = pneg %p243
        %p510 = pneg %p267
        %p511 = pneg %p264
        %p512 = pneg %p288
        %p513 = pneg %p285
        %p514 = pneg %p309
        %p515 = pneg %p306
        %p516 = pneg %p330
        %p517 = pneg %p327
        %p518 = pneg %p351
        %p519 = pneg %p348
        %p520 = pneg %p379
        %p521 = pneg %p376
        %s522 = sand.u32 %s366, 1
        %s523 = scalar_lea.sflag [#allocation3], %s522
        %s524 = sand.u32 %s366, 1
        %s525 = smul.addr %s524, 16
        %s526 = scalar_lea.vmem [#allocation2], %s525
        %s527 = smul.u32 2, %s33
        %p528 = scmp.lt.s32.totalorder %s32, 1
        %s529 = scalar_select %p528, %s32, 1
        %p530 = scmp.lt.s32.totalorder %s527, 1
        %s531 = scalar_select %p530, %s527, 1
        %s532 = smul.addr %s529, 2
        %s533 = sadd.s32 %s531, %s532
        %s534 = smul.addr %s533, 8
        %s535 = scalar_lea.vmem %s0, %s534
        %s536 = smul.u32 2, %s33
        %p537 = scmp.lt.s32.totalorder %s32, 1
        %s538 = scalar_select %p537, %s32, 1
        %s539 = scalar_lea.vmem %s1, %s538
        %p540 = scmp.lt.s32.totalorder %s32, 1
        %s541 = scalar_select %p540, %s32, 1
        %s542 = smul.addr %s541, 4
        %s543 = smul.addr %s542, 8
        %s544 = scalar_lea.vmem %s2, %s543
        %p545 = scmp.lt.s32.totalorder %s32, 1
        %s546 = scalar_select %p545, %s32, 1
        %s547 = smul.addr %s546, 8
        %s548 = smul.addr %s547, 8
        %s549 = scalar_lea.vmem %s3, %s548
        %s550 = smul.u32 2, %s33
        %v551 = vld [vmem:[%s535] sm:$0xff]
        %v552 = vld [vmem:[%s535 + $0x8] sm:$0xff]
        %v553 = vld [vmem:[%s539] sm:$0x1]
        %vm554 = vcmp.eq.f32.partialorder %v553, 0.0
        %v555 = vsel %vm554, -1e+10, 0.0
        %v557 = vlaneseq
        %v558 = vshrl.u32 %v557, 7
        %v559 = vsub.s32 0, %v558
        %v560 = vrot.slane %v555, %v559
        %v562 = vld [vmem:[%s4] sm:$0xff]
        %v563 = vld [vmem:[%s4 + $0x8] sm:$0xff]
        %v564 = vld [vmem:[%s4 + $0x10] sm:$0xff]
        %v565 = vld [vmem:[%s4 + $0x18] sm:$0xff]
        %v566 = vld [vmem:[%s5] sm:$0x1]
        %v568 = vlaneseq
        %v569 = vshrl.u32 %v568, 7
        %v570 = vsub.s32 0, %v569
        %v571 = vrot.slane %v566, %v570
        %vm573 = vcmask 261120
        %v575 = vsel %vm573, %v551, 0
        %v578 = vsel %vm573, %v552, 0
        %580 = vmatprep.subr.mxu0 0.0
        %581 = vmatpush1.msra.mxu0 0.0
        %582 = vmatprep.subr.mxu0 0.0
        %583 = vmatpush1.msra.mxu0 0.0
        %584 = vmatprep.subr.mxu0 0.0
        %585 = vmatpush1.msra.mxu0 0.0
        %586 = vmatprep.subr.mxu0 0.0
        %587 = vmatpush1.msra.mxu0 0.0
        %588 = vmatprep.subr.mxu0 0.0
        %589 = vmatpush1.msra.mxu0 0.0
        %590 = vmatprep.subr.mxu0 0.0
        %591 = vmatpush1.msra.mxu0 0.0
        %592 = vmatprep.subr.mxu0 0.0
        %593 = vmatpush1.msra.mxu0 0.0
        %594 = vmatprep.subr.mxu0 0.0
        %595 = vmatpush1.msra.mxu0 0.0
        %596 = vmatprep.subr.mxu0 0.0
        %597 = vmatpush1.msra.mxu0 0.0
        %598 = vmatprep.subr.mxu0 0.0
        %599 = vmatpush1.msra.mxu0 0.0
        %600 = vmatprep.subr.mxu0 0.0
        %601 = vmatpush1.msra.mxu0 0.0
        %602 = vmatprep.subr.mxu0 0.0
        %603 = vmatpush1.msra.mxu0 0.0
        %604 = vmatprep.subr.mxu0 0.0
        %605 = vmatpush1.msra.mxu0 %v565
        %606 = vmatprep.subr.mxu0 0.0
        %607 = vmatpush1.msra.mxu0 %v564
        %608 = vmatprep.subr.mxu0 0.0
        %609 = vmatpush1.msra.mxu0 %v563
        %610 = vmatprep.subr.mxu0 0.0
        %611 = vmatpush1.msra.mxu0 %v562
        %612 = vmatprep.subr.mxu0 0.0
        %613 = vmatpush2.msra.mxu0 0.0
        %614 = vmatprep.subr.mxu0 0.0
        %615 = vmatpush2.msra.mxu0 0.0
        %616 = vmatprep.subr.mxu0 0.0
        %617 = vmatpush2.msra.mxu0 0.0
        %618 = vmatprep.subr.mxu0 0.0
        %619 = vmatpush2.msra.mxu0 0.0
        %620 = vmatprep.subr.mxu0 0.0
        %621 = vmatpush2.msra.mxu0 0.0
        %622 = vmatprep.subr.mxu0 0.0
        %623 = vmatpush2.msra.mxu0 0.0
        %624 = vmatprep.subr.mxu0 0.0
        %625 = vmatpush2.msra.mxu0 0.0
        %626 = vmatprep.subr.mxu0 0.0
        %627 = vmatpush2.msra.mxu0 0.0
        %628 = vmatprep.subr.mxu0 0.0
        %629 = vmatpush2.msra.mxu0 0.0
        %630 = vmatprep.subr.mxu0 0.0
        %631 = vmatpush2.msra.mxu0 0.0
        %632 = vmatprep.subr.mxu0 0.0
        %633 = vmatpush2.msra.mxu0 0.0
        %634 = vmatprep.subr.mxu0 0.0
        %635 = vmatpush2.msra.mxu0 0.0
        %636 = vmatprep.subr.mxu0 0.0
        %637 = vmatpush2.msra.mxu0 0.0
        %638 = vmatprep.subr.mxu0 0.0
        %639 = vmatpush2.msra.mxu0 0.0
        %640 = vmatprep.subr.mxu0 0.0
        %641 = vmatpush2.msra.mxu0 0.0
        %642 = vmatprep.subr.mxu0 0.0
        %643 = vmatpush2.msra.mxu0 0.0
        %644 = vmatprep.mubr.f32.mxu0 0.0
        %645 = vmatmul.mubr.f32.gmra.mxu0 %v575
        %v646 = vpop.f32.mrf.mxu0
        %v647 = vadd.f32 %v571, %v646
        %v648 = vpop.f32.mrf.mxu0
        %649 = vmatprep.mubr.f32.mxu0 0.0
        %650 = vmatmul.mubr.f32.gmra.mxu0 %v578
        %v651 = vpop.f32.mrf.mxu0
        %v652 = vadd.f32 %v571, %v651
        %v653 = vpop.f32.mrf.mxu0
        %654 = vdwg.mxu0
        %v655 = vmul.f32 %v647, 0.35355338
        %v656 = vmul.f32 %v652, 0.35355338
        %v657 = vld [vmem:[%s544] sm:$0xff]
        %vm658 = vcmask 64512
        %v660 = vsel %vm658, %v655, 0
        %v663 = vsel %vm658, %v656, 0
        %665 = vmatprep.subr.mxu0 0.0
        %666 = vmatpush1.msra.mxu0 0.0
        %667 = vmatprep.subr.mxu0 0.0
        %668 = vmatpush1.msra.mxu0 0.0
        %669 = vmatprep.subr.mxu0 0.0
        %670 = vmatpush1.msra.mxu0 0.0
        %671 = vmatprep.subr.mxu0 0.0
        %672 = vmatpush1.msra.mxu0 0.0
        %673 = vmatprep.subr.mxu0 0.0
        %674 = vmatpush1.msra.mxu0 0.0
        %675 = vmatprep.subr.mxu0 0.0
        %676 = vmatpush1.msra.mxu0 0.0
        %677 = vmatprep.subr.mxu0 0.0
        %678 = vmatpush1.msra.mxu0 0.0
        %679 = vmatprep.subr.mxu0 0.0
        %680 = vmatpush1.msra.mxu0 0.0
        %681 = vmatprep.subr.mxu0 0.0
        %682 = vmatpush1.msra.mxu0 0.0
        %683 = vmatprep.subr.mxu0 0.0
        %684 = vmatpush1.msra.mxu0 0.0
        %685 = vmatprep.subr.mxu0 0.0
        %686 = vmatpush1.msra.mxu0 0.0
        %687 = vmatprep.subr.mxu0 0.0
        %688 = vmatpush1.msra.mxu0 0.0
        %689 = vmatprep.subr.mxu0 0.0
        %690 = vmatpush1.msra.mxu0 0.0
        %691 = vmatprep.subr.mxu0 0.0
        %692 = vmatpush1.msra.mxu0 0.0
        %693 = vmatprep.subr.mxu0 0.0
        %694 = vmatpush1.msra.mxu0 0.0
        %695 = vmatprep.subr.mxu0 0.0
        %696 = vmatpush1.msra.mxu0 %v657
        %697 = vmatprep.subr.mxu0 0.0
        %698 = vmatpush2.msra.mxu0 0.0
        %699 = vmatprep.subr.mxu0 0.0
        %700 = vmatpush2.msra.mxu0 0.0
        %701 = vmatprep.subr.mxu0 0.0
        %702 = vmatpush2.msra.mxu0 0.0
        %703 = vmatprep.subr.mxu0 0.0
        %704 = vmatpush2.msra.mxu0 0.0
        %705 = vmatprep.subr.mxu0 0.0
        %706 = vmatpush2.msra.mxu0 0.0
        %707 = vmatprep.subr.mxu0 0.0
        %708 = vmatpush2.msra.mxu0 0.0
        %709 = vmatprep.subr.mxu0 0.0
        %710 = vmatpush2.msra.mxu0 0.0
        %711 = vmatprep.subr.mxu0 0.0
        %712 = vmatpush2.msra.mxu0 0.0
        %713 = vmatprep.subr.mxu0 0.0
        %714 = vmatpush2.msra.mxu0 0.0
        %715 = vmatprep.subr.mxu0 0.0
        %716 = vmatpush2.msra.mxu0 0.0
        %717 = vmatprep.subr.mxu0 0.0
        %718 = vmatpush2.msra.mxu0 0.0
        %719 = vmatprep.subr.mxu0 0.0
        %720 = vmatpush2.msra.mxu0 0.0
        %721 = vmatprep.subr.mxu0 0.0
        %722 = vmatpush2.msra.mxu0 0.0
        %723 = vmatprep.subr.mxu0 0.0
        %724 = vmatpush2.msra.mxu0 0.0
        %725 = vmatprep.subr.mxu0 0.0
        %726 = vmatpush2.msra.mxu0 0.0
        %727 = vmatprep.subr.mxu0 0.0
        %728 = vmatpush2.msra.mxu0 0.0
        %729 = vmatprep.mubr.f32.mxu0 0.0
        %730 = vmatmul.mubr.f32.gmra.mxu0 %v660
        %v731 = vpop.f32.mrf.mxu0
        %v732 = vadd.f32 %v560, %v731
        %v733 = vpop.f32.mrf.mxu0
        %734 = vmatprep.mubr.f32.mxu0 0.0
        %735 = vmatmul.mubr.f32.gmra.mxu0 %v663
        %v736 = vpop.f32.mrf.mxu0
        %v737 = vadd.f32 %v560, %v736
        %v738 = vpop.f32.mrf.mxu0
        %739 = vdwg.mxu0
        %vm740 = vcmask 130048
        %v741 = vsel %vm740, %v732, -inf
        %742 = vmax.xlane.f32.xlu0 %v741
        %v743 = vpop.xlane.xlu0 %742
        %v744 = vsel %vm740, %v737, -inf
        %745 = vmax.xlane.f32.xlu0 %v744
        %v746 = vpop.xlane.xlu0 %745
        %v747 = vsub.f32 %v732, %v743
        %v748 = vsub.f32 %v737, %v746
        %v749 = vmul.f32 %v747, 1.442695
        %v750 = vpow.pop %v749
        %v751 = vmul.f32 %v748, 1.442695
        %v752 = vpow.pop %v751
        %v753 = vsel %vm740, %v750, 0.0
        %754 = vadd.xlane.f32.xlu0 %v753
        %v755 = vpop.xlane.xlu0 %754
        %v756 = vsel %vm740, %v752, 0.0
        %757 = vadd.xlane.f32.xlu0 %v756
        %v758 = vpop.xlane.xlu0 %757
        %v759 = vrcp.pop %v755
        %v760 = vrcp.pop %v758
        %v761 = vmul.f32 %v750, %v759
        %v762 = vmul.f32 %v752, %v760
        %v763 = vld [vmem:[%s549] sm:$0xff]
        %v764 = vld [vmem:[%s549 + $0x8] sm:$0xff]
        %v766 = vsel %vm740, %v761, 0
        %v769 = vsel %vm740, %v762, 0
        %771 = vmatprep.subr.mxu0 0.0
        %772 = vmatpush1.msra.mxu0 0.0
        %773 = vmatprep.subr.mxu0 0.0
        %774 = vmatpush1.msra.mxu0 0.0
        %775 = vmatprep.subr.mxu0 0.0
        %776 = vmatpush1.msra.mxu0 0.0
        %777 = vmatprep.subr.mxu0 0.0
        %778 = vmatpush1.msra.mxu0 0.0
        %779 = vmatprep.subr.mxu0 0.0
        %780 = vmatpush1.msra.mxu0 0.0
        %781 = vmatprep.subr.mxu0 0.0
        %782 = vmatpush1.msra.mxu0 0.0
        %783 = vmatprep.subr.mxu0 0.0
        %784 = vmatpush1.msra.mxu0 0.0
        %785 = vmatprep.subr.mxu0 0.0
        %786 = vmatpush1.msra.mxu0 0.0
        %787 = vmatprep.subr.mxu0 0.0
        %788 = vmatpush1.msra.mxu0 0.0
        %789 = vmatprep.subr.mxu0 0.0
        %790 = vmatpush1.msra.mxu0 0.0
        %791 = vmatprep.subr.mxu0 0.0
        %792 = vmatpush1.msra.mxu0 0.0
        %793 = vmatprep.subr.mxu0 0.0
        %794 = vmatpush1.msra.mxu0 0.0
        %795 = vmatprep.subr.mxu0 0.0
        %796 = vmatpush1.msra.mxu0 0.0
        %797 = vmatprep.subr.mxu0 0.0
        %798 = vmatpush1.msra.mxu0 0.0
        %799 = vmatprep.subr.mxu0 0.0
        %800 = vmatpush1.msra.mxu0 %v764
        %801 = vmatprep.subr.mxu0 0.0
        %802 = vmatpush1.msra.mxu0 %v763
        %803 = vmatprep.subr.mxu0 0.0
        %804 = vmatpush2.msra.mxu0 0.0
        %805 = vmatprep.subr.mxu0 0.0
        %806 = vmatpush2.msra.mxu0 0.0
        %807 = vmatprep.subr.mxu0 0.0
        %808 = vmatpush2.msra.mxu0 0.0
        %809 = vmatprep.subr.mxu0 0.0
        %810 = vmatpush2.msra.mxu0 0.0
        %811 = vmatprep.subr.mxu0 0.0
        %812 = vmatpush2.msra.mxu0 0.0
        %813 = vmatprep.subr.mxu0 0.0
        %814 = vmatpush2.msra.mxu0 0.0
        %815 = vmatprep.subr.mxu0 0.0
        %816 = vmatpush2.msra.mxu0 0.0
        %817 = vmatprep.subr.mxu0 0.0
        %818 = vmatpush2.msra.mxu0 0.0
        %819 = vmatprep.subr.mxu0 0.0
        %820 = vmatpush2.msra.mxu0 0.0
        %821 = vmatprep.subr.mxu0 0.0
        %822 = vmatpush2.msra.mxu0 0.0
        %823 = vmatprep.subr.mxu0 0.0
        %824 = vmatpush2.msra.mxu0 0.0
        %825 = vmatprep.subr.mxu0 0.0
        %826 = vmatpush2.msra.mxu0 0.0
        %827 = vmatprep.subr.mxu0 0.0
        %828 = vmatpush2.msra.mxu0 0.0
        %829 = vmatprep.subr.mxu0 0.0
        %830 = vmatpush2.msra.mxu0 0.0
        %831 = vmatprep.subr.mxu0 0.0
        %832 = vmatpush2.msra.mxu0 0.0
        %833 = vmatprep.subr.mxu0 0.0
        %834 = vmatpush2.msra.mxu0 0.0
        %835 = vmatprep.mubr.f32.mxu0 0.0
        %836 = vmatmul.mubr.f32.gmra.mxu0 %v766
        %v837 = vpop.f32.mrf.mxu0
        %v838 = vadd.f32 0.0, %v837
        %v839 = vpop.f32.mrf.mxu0
        %840 = vmatprep.mubr.f32.mxu0 0.0
        %841 = vmatmul.mubr.f32.gmra.mxu0 %v769
        %v842 = vpop.f32.mrf.mxu0
        %v843 = vadd.f32 0.0, %v842
        %v844 = vpop.f32.mrf.mxu0
        %845 = vdwg.mxu0
        %v846 = vld [vmem:[%s6] sm:$0xff]
        %s847 = scalar_lea.vmem %s4, 32
        %v848 = vld [vmem:[%s847] sm:$0xff]
        %v849 = vld [vmem:[%s847 + $0x8] sm:$0xff]
        %v850 = vld [vmem:[%s847 + $0x10] sm:$0xff]
        %v851 = vld [vmem:[%s847 + $0x18] sm:$0xff]
        %s852 = scalar_lea.vmem %s5, 1
        %v853 = vld [vmem:[%s852] sm:$0x1]
        %v855 = vlaneseq
        %v856 = vshrl.u32 %v855, 7
        %v857 = vsub.s32 0, %v856
        %v858 = vrot.slane %v853, %v857
        %860 = vmatprep.subr.mxu0 0.0
        %861 = vmatpush1.msra.mxu0 0.0
        %862 = vmatprep.subr.mxu0 0.0
        %863 = vmatpush1.msra.mxu0 0.0
        %864 = vmatprep.subr.mxu0 0.0
        %865 = vmatpush1.msra.mxu0 0.0
        %866 = vmatprep.subr.mxu0 0.0
        %867 = vmatpush1.msra.mxu0 0.0
        %868 = vmatprep.subr.mxu0 0.0
        %869 = vmatpush1.msra.mxu0 0.0
        %870 = vmatprep.subr.mxu0 0.0
        %871 = vmatpush1.msra.mxu0 0.0
        %872 = vmatprep.subr.mxu0 0.0
        %873 = vmatpush1.msra.mxu0 0.0
        %874 = vmatprep.subr.mxu0 0.0
        %875 = vmatpush1.msra.mxu0 0.0
        %876 = vmatprep.subr.mxu0 0.0
        %877 = vmatpush1.msra.mxu0 0.0
        %878 = vmatprep.subr.mxu0 0.0
        %879 = vmatpush1.msra.mxu0 0.0
        %880 = vmatprep.subr.mxu0 0.0
        %881 = vmatpush1.msra.mxu0 0.0
        %882 = vmatprep.subr.mxu0 0.0
        %883 = vmatpush1.msra.mxu0 0.0
        %884 = vmatprep.subr.mxu0 0.0
        %885 = vmatpush1.msra.mxu0 %v851
        %886 = vmatprep.subr.mxu0 0.0
        %887 = vmatpush1.msra.mxu0 %v850
        %888 = vmatprep.subr.mxu0 0.0
        %889 = vmatpush1.msra.mxu0 %v849
        %890 = vmatprep.subr.mxu0 0.0
        %891 = vmatpush1.msra.mxu0 %v848
        %892 = vmatprep.subr.mxu0 0.0
        %893 = vmatpush2.msra.mxu0 0.0
        %894 = vmatprep.subr.mxu0 0.0
        %895 = vmatpush2.msra.mxu0 0.0
        %896 = vmatprep.subr.mxu0 0.0
        %897 = vmatpush2.msra.mxu0 0.0
        %898 = vmatprep.subr.mxu0 0.0
        %899 = vmatpush2.msra.mxu0 0.0
        %900 = vmatprep.subr.mxu0 0.0
        %901 = vmatpush2.msra.mxu0 0.0
        %902 = vmatprep.subr.mxu0 0.0
        %903 = vmatpush2.msra.mxu0 0.0
        %904 = vmatprep.subr.mxu0 0.0
        %905 = vmatpush2.msra.mxu0 0.0
        %906 = vmatprep.subr.mxu0 0.0
        %907 = vmatpush2.msra.mxu0 0.0
        %908 = vmatprep.subr.mxu0 0.0
        %909 = vmatpush2.msra.mxu0 0.0
        %910 = vmatprep.subr.mxu0 0.0
        %911 = vmatpush2.msra.mxu0 0.0
        %912 = vmatprep.subr.mxu0 0.0
        %913 = vmatpush2.msra.mxu0 0.0
        %914 = vmatprep.subr.mxu0 0.0
        %915 = vmatpush2.msra.mxu0 0.0
        %916 = vmatprep.subr.mxu0 0.0
        %917 = vmatpush2.msra.mxu0 0.0
        %918 = vmatprep.subr.mxu0 0.0
        %919 = vmatpush2.msra.mxu0 0.0
        %920 = vmatprep.subr.mxu0 0.0
        %921 = vmatpush2.msra.mxu0 0.0
        %922 = vmatprep.subr.mxu0 0.0
        %923 = vmatpush2.msra.mxu0 0.0
        %924 = vmatprep.mubr.f32.mxu0 0.0
        %925 = vmatmul.mubr.f32.gmra.mxu0 %v575
        %v926 = vpop.f32.mrf.mxu0
        %v927 = vadd.f32 %v858, %v926
        %v928 = vpop.f32.mrf.mxu0
        %929 = vmatprep.mubr.f32.mxu0 0.0
        %930 = vmatmul.mubr.f32.gmra.mxu0 %v578
        %v931 = vpop.f32.mrf.mxu0
        %v932 = vadd.f32 %v858, %v931
        %v933 = vpop.f32.mrf.mxu0
        %934 = vdwg.mxu0
        %v935 = vmul.f32 %v927, 0.35355338
        %v936 = vmul.f32 %v932, 0.35355338
        %s937 = scalar_lea.vmem %s544, 8
        %v938 = vld [vmem:[%s937] sm:$0xff]
        %v940 = vsel %vm658, %v935, 0
        %v943 = vsel %vm658, %v936, 0
        %945 = vmatprep.subr.mxu0 0.0
        %946 = vmatpush1.msra.mxu0 0.0
        %947 = vmatprep.subr.mxu0 0.0
        %948 = vmatpush1.msra.mxu0 0.0
        %949 = vmatprep.subr.mxu0 0.0
        %950 = vmatpush1.msra.mxu0 0.0
        %951 = vmatprep.subr.mxu0 0.0
        %952 = vmatpush1.msra.mxu0 0.0
        %953 = vmatprep.subr.mxu0 0.0
        %954 = vmatpush1.msra.mxu0 0.0
        %955 = vmatprep.subr.mxu0 0.0
        %956 = vmatpush1.msra.mxu0 0.0
        %957 = vmatprep.subr.mxu0 0.0
        %958 = vmatpush1.msra.mxu0 0.0
        %959 = vmatprep.subr.mxu0 0.0
        %960 = vmatpush1.msra.mxu0 0.0
        %961 = vmatprep.subr.mxu0 0.0
        %962 = vmatpush1.msra.mxu0 0.0
        %963 = vmatprep.subr.mxu0 0.0
        %964 = vmatpush1.msra.mxu0 0.0
        %965 = vmatprep.subr.mxu0 0.0
        %966 = vmatpush1.msra.mxu0 0.0
        %967 = vmatprep.subr.mxu0 0.0
        %968 = vmatpush1.msra.mxu0 0.0
        %969 = vmatprep.subr.mxu0 0.0
        %970 = vmatpush1.msra.mxu0 0.0
        %971 = vmatprep.subr.mxu0 0.0
        %972 = vmatpush1.msra.mxu0 0.0
        %973 = vmatprep.subr.mxu0 0.0
        %974 = vmatpush1.msra.mxu0 0.0
        %975 = vmatprep.subr.mxu0 0.0
        %976 = vmatpush1.msra.mxu0 %v938
        %977 = vmatprep.subr.mxu0 0.0
        %978 = vmatpush2.msra.mxu0 0.0
        %979 = vmatprep.subr.mxu0 0.0
        %980 = vmatpush2.msra.mxu0 0.0
        %981 = vmatprep.subr.mxu0 0.0
        %982 = vmatpush2.msra.mxu0 0.0
        %983 = vmatprep.subr.mxu0 0.0
        %984 = vmatpush2.msra.mxu0 0.0
        %985 = vmatprep.subr.mxu0 0.0
        %986 = vmatpush2.msra.mxu0 0.0
        %987 = vmatprep.subr.mxu0 0.0
        %988 = vmatpush2.msra.mxu0 0.0
        %989 = vmatprep.subr.mxu0 0.0
        %990 = vmatpush2.msra.mxu0 0.0
        %991 = vmatprep.subr.mxu0 0.0
        %992 = vmatpush2.msra.mxu0 0.0
        %993 = vmatprep.subr.mxu0 0.0
        %994 = vmatpush2.msra.mxu0 0.0
        %995 = vmatprep.subr.mxu0 0.0
        %996 = vmatpush2.msra.mxu0 0.0
        %997 = vmatprep.subr.mxu0 0.0
        %998 = vmatpush2.msra.mxu0 0.0
        %999 = vmatprep.subr.mxu0 0.0
        %1000 = vmatpush2.msra.mxu0 0.0
        %1001 = vmatprep.subr.mxu0 0.0
        %1002 = vmatpush2.msra.mxu0 0.0
        %1003 = vmatprep.subr.mxu0 0.0
        %1004 = vmatpush2.msra.mxu0 0.0
        %1005 = vmatprep.subr.mxu0 0.0
        %1006 = vmatpush2.msra.mxu0 0.0
        %1007 = vmatprep.subr.mxu0 0.0
        %1008 = vmatpush2.msra.mxu0 0.0
        %1009 = vmatprep.mubr.f32.mxu0 0.0
        %1010 = vmatmul.mubr.f32.gmra.mxu0 %v940
        %v1011 = vpop.f32.mrf.mxu0
        %v1012 = vadd.f32 %v560, %v1011
        %v1013 = vpop.f32.mrf.mxu0
        %1014 = vmatprep.mubr.f32.mxu0 0.0
        %1015 = vmatmul.mubr.f32.gmra.mxu0 %v943
        %v1016 = vpop.f32.mrf.mxu0
        %v1017 = vadd.f32 %v560, %v1016
        %v1018 = vpop.f32.mrf.mxu0
        %1019 = vdwg.mxu0
        %v1020 = vsel %vm740, %v1012, -inf
        %1021 = vmax.xlane.f32.xlu0 %v1020
        %v1022 = vpop.xlane.xlu0 %1021
        %v1023 = vsel %vm740, %v1017, -inf
        %1024 = vmax.xlane.f32.xlu0 %v1023
        %v1025 = vpop.xlane.xlu0 %1024
        %v1026 = vsub.f32 %v1012, %v1022
        %v1027 = vsub.f32 %v1017, %v1025
        %v1028 = vmul.f32 %v1026, 1.442695
        %v1029 = vpow.pop %v1028
        %v1030 = vmul.f32 %v1027, 1.442695
        %v1031 = vpow.pop %v1030
        %v1032 = vsel %vm740, %v1029, 0.0
        %1033 = vadd.xlane.f32.xlu0 %v1032
        %v1034 = vpop.xlane.xlu0 %1033
        %v1035 = vsel %vm740, %v1031, 0.0
        %1036 = vadd.xlane.f32.xlu0 %v1035
        %v1037 = vpop.xlane.xlu0 %1036
        %v1038 = vrcp.pop %v1034
        %v1039 = vrcp.pop %v1037
        %v1040 = vmul.f32 %v1029, %v1038
        %v1041 = vmul.f32 %v1031, %v1039
        %s1042 = scalar_lea.vmem %s549, 16
        %v1043 = vld [vmem:[%s1042] sm:$0xff]
        %v1044 = vld [vmem:[%s1042 + $0x8] sm:$0xff]
        %v1046 = vsel %vm740, %v1040, 0
        %v1049 = vsel %vm740, %v1041, 0
        %1051 = vmatprep.subr.mxu0 0.0
        %1052 = vmatpush1.msra.mxu0 0.0
        %1053 = vmatprep.subr.mxu0 0.0
        %1054 = vmatpush1.msra.mxu0 0.0
        %1055 = vmatprep.subr.mxu0 0.0
        %1056 = vmatpush1.msra.mxu0 0.0
        %1057 = vmatprep.subr.mxu0 0.0
        %1058 = vmatpush1.msra.mxu0 0.0
        %1059 = vmatprep.subr.mxu0 0.0
        %1060 = vmatpush1.msra.mxu0 0.0
        %1061 = vmatprep.subr.mxu0 0.0
        %1062 = vmatpush1.msra.mxu0 0.0
        %1063 = vmatprep.subr.mxu0 0.0
        %1064 = vmatpush1.msra.mxu0 0.0
        %1065 = vmatprep.subr.mxu0 0.0
        %1066 = vmatpush1.msra.mxu0 0.0
        %1067 = vmatprep.subr.mxu0 0.0
        %1068 = vmatpush1.msra.mxu0 0.0
        %1069 = vmatprep.subr.mxu0 0.0
        %1070 = vmatpush1.msra.mxu0 0.0
        %1071 = vmatprep.subr.mxu0 0.0
        %1072 = vmatpush1.msra.mxu0 0.0
        %1073 = vmatprep.subr.mxu0 0.0
        %1074 = vmatpush1.msra.mxu0 0.0
        %1075 = vmatprep.subr.mxu0 0.0
        %1076 = vmatpush1.msra.mxu0 0.0
        %1077 = vmatprep.subr.mxu0 0.0
        %1078 = vmatpush1.msra.mxu0 0.0
        %1079 = vmatprep.subr.mxu0 0.0
        %1080 = vmatpush1.msra.mxu0 %v1044
        %1081 = vmatprep.subr.mxu0 0.0
        %1082 = vmatpush1.msra.mxu0 %v1043
        %1083 = vmatprep.subr.mxu0 0.0
        %1084 = vmatpush2.msra.mxu0 0.0
        %1085 = vmatprep.subr.mxu0 0.0
        %1086 = vmatpush2.msra.mxu0 0.0
        %1087 = vmatprep.subr.mxu0 0.0
        %1088 = vmatpush2.msra.mxu0 0.0
        %1089 = vmatprep.subr.mxu0 0.0
        %1090 = vmatpush2.msra.mxu0 0.0
        %1091 = vmatprep.subr.mxu0 0.0
        %1092 = vmatpush2.msra.mxu0 0.0
        %1093 = vmatprep.subr.mxu0 0.0
        %1094 = vmatpush2.msra.mxu0 0.0
        %1095 = vmatprep.subr.mxu0 0.0
        %1096 = vmatpush2.msra.mxu0 0.0
        %1097 = vmatprep.subr.mxu0 0.0
        %1098 = vmatpush2.msra.mxu0 0.0
        %1099 = vmatprep.subr.mxu0 0.0
        %1100 = vmatpush2.msra.mxu0 0.0
        %1101 = vmatprep.subr.mxu0 0.0
        %1102 = vmatpush2.msra.mxu0 0.0
        %1103 = vmatprep.subr.mxu0 0.0
        %1104 = vmatpush2.msra.mxu0 0.0
        %1105 = vmatprep.subr.mxu0 0.0
        %1106 = vmatpush2.msra.mxu0 0.0
        %1107 = vmatprep.subr.mxu0 0.0
        %1108 = vmatpush2.msra.mxu0 0.0
        %1109 = vmatprep.subr.mxu0 0.0
        %1110 = vmatpush2.msra.mxu0 0.0
        %1111 = vmatprep.subr.mxu0 0.0
        %1112 = vmatpush2.msra.mxu0 0.0
        %1113 = vmatprep.subr.mxu0 0.0
        %1114 = vmatpush2.msra.mxu0 0.0
        %1115 = vmatprep.mubr.f32.mxu0 0.0
        %1116 = vmatmul.mubr.f32.gmra.mxu0 %v1046
        %v1117 = vpop.f32.mrf.mxu0
        %v1118 = vadd.f32 0.0, %v1117
        %v1119 = vpop.f32.mrf.mxu0
        %1120 = vmatprep.mubr.f32.mxu0 0.0
        %1121 = vmatmul.mubr.f32.gmra.mxu0 %v1049
        %v1122 = vpop.f32.mrf.mxu0
        %v1123 = vadd.f32 0.0, %v1122
        %v1124 = vpop.f32.mrf.mxu0
        %1125 = vdwg.mxu0
        %s1126 = scalar_lea.vmem %s6, 8
        %v1127 = vld [vmem:[%s1126] sm:$0xff]
        %v1129 = vsel %vm658, %v1118, 0
        %v1132 = vsel %vm658, %v1123, 0
        %1134 = vmatprep.subr.mxu0 0.0
        %1135 = vmatpush1.msra.mxu0 0.0
        %1136 = vmatprep.subr.mxu0 0.0
        %1137 = vmatpush1.msra.mxu0 0.0
        %1138 = vmatprep.subr.mxu0 0.0
        %1139 = vmatpush1.msra.mxu0 0.0
        %1140 = vmatprep.subr.mxu0 0.0
        %1141 = vmatpush1.msra.mxu0 0.0
        %1142 = vmatprep.subr.mxu0 0.0
        %1143 = vmatpush1.msra.mxu0 0.0
        %1144 = vmatprep.subr.mxu0 0.0
        %1145 = vmatpush1.msra.mxu0 0.0
        %1146 = vmatprep.subr.mxu0 0.0
        %1147 = vmatpush1.msra.mxu0 0.0
        %1148 = vmatprep.subr.mxu0 0.0
        %1149 = vmatpush1.msra.mxu0 0.0
        %1150 = vmatprep.subr.mxu0 0.0
        %1151 = vmatpush1.msra.mxu0 0.0
        %1152 = vmatprep.subr.mxu0 0.0
        %1153 = vmatpush1.msra.mxu0 0.0
        %1154 = vmatprep.subr.mxu0 0.0
        %1155 = vmatpush1.msra.mxu0 0.0
        %1156 = vmatprep.subr.mxu0 0.0
        %1157 = vmatpush1.msra.mxu0 0.0
        %1158 = vmatprep.subr.mxu0 0.0
        %1159 = vmatpush1.msra.mxu0 0.0
        %1160 = vmatprep.subr.mxu0 0.0
        %1161 = vmatpush1.msra.mxu0 0.0
        %1162 = vmatprep.subr.mxu0 0.0
        %1163 = vmatpush1.msra.mxu0 0.0
        %1164 = vmatprep.subr.mxu0 0.0
        %1165 = vmatpush1.msra.mxu0 %v1127
        %1166 = vmatprep.subr.mxu0 0.0
        %1167 = vmatpush2.msra.mxu0 0.0
        %1168 = vmatprep.subr.mxu0 0.0
        %1169 = vmatpush2.msra.mxu0 0.0
        %1170 = vmatprep.subr.mxu0 0.0
        %1171 = vmatpush2.msra.mxu0 0.0
        %1172 = vmatprep.subr.mxu0 0.0
        %1173 = vmatpush2.msra.mxu0 0.0
        %1174 = vmatprep.subr.mxu0 0.0
        %1175 = vmatpush2.msra.mxu0 0.0
        %1176 = vmatprep.subr.mxu0 0.0
        %1177 = vmatpush2.msra.mxu0 0.0
        %1178 = vmatprep.subr.mxu0 0.0
        %1179 = vmatpush2.msra.mxu0 0.0
        %1180 = vmatprep.subr.mxu0 0.0
        %1181 = vmatpush2.msra.mxu0 0.0
        %1182 = vmatprep.subr.mxu0 0.0
        %1183 = vmatpush2.msra.mxu0 0.0
        %1184 = vmatprep.subr.mxu0 0.0
        %1185 = vmatpush2.msra.mxu0 0.0
        %1186 = vmatprep.subr.mxu0 0.0
        %1187 = vmatpush2.msra.mxu0 0.0
        %1188 = vmatprep.subr.mxu0 0.0
        %1189 = vmatpush2.msra.mxu0 0.0
        %1190 = vmatprep.subr.mxu0 0.0
        %1191 = vmatpush2.msra.mxu0 0.0
        %1192 = vmatprep.subr.mxu0 0.0
        %1193 = vmatpush2.msra.mxu0 0.0
        %1194 = vmatprep.subr.mxu0 0.0
        %1195 = vmatpush2.msra.mxu0 0.0
        %1196 = vmatprep.subr.mxu0 0.0
        %1197 = vmatpush2.msra.mxu0 0.0
        %1198 = vmatprep.mubr.f32.mxu0 0.0
        %1199 = vmatmul.mubr.f32.gmra.mxu0 %v1129
        %v1200 = vpop.f32.mrf.mxu0
        %v1201 = vadd.f32 0.0, %v1200
        %v1202 = vpop.f32.mrf.mxu0
        %1203 = vmatprep.mubr.f32.mxu0 0.0
        %1204 = vmatmul.mubr.f32.gmra.mxu0 %v1132
        %v1205 = vpop.f32.mrf.mxu0
        %v1206 = vadd.f32 0.0, %v1205
        %v1207 = vpop.f32.mrf.mxu0
        %1208 = vdwg.mxu0
        %v1210 = vsel %vm658, %v838, 0
        %v1213 = vsel %vm658, %v843, 0
        %1215 = vmatprep.subr.mxu0 0.0
        %1216 = vmatpush1.msra.mxu0 0.0
        %1217 = vmatprep.subr.mxu0 0.0
        %1218 = vmatpush1.msra.mxu0 0.0
        %1219 = vmatprep.subr.mxu0 0.0
        %1220 = vmatpush1.msra.mxu0 0.0
        %1221 = vmatprep.subr.mxu0 0.0
        %1222 = vmatpush1.msra.mxu0 0.0
        %1223 = vmatprep.subr.mxu0 0.0
        %1224 = vmatpush1.msra.mxu0 0.0
        %1225 = vmatprep.subr.mxu0 0.0
        %1226 = vmatpush1.msra.mxu0 0.0
        %1227 = vmatprep.subr.mxu0 0.0
        %1228 = vmatpush1.msra.mxu0 0.0
        %1229 = vmatprep.subr.mxu0 0.0
        %1230 = vmatpush1.msra.mxu0 0.0
        %1231 = vmatprep.subr.mxu0 0.0
        %1232 = vmatpush1.msra.mxu0 0.0
        %1233 = vmatprep.subr.mxu0 0.0
        %1234 = vmatpush1.msra.mxu0 0.0
        %1235 = vmatprep.subr.mxu0 0.0
        %1236 = vmatpush1.msra.mxu0 0.0
        %1237 = vmatprep.subr.mxu0 0.0
        %1238 = vmatpush1.msra.mxu0 0.0
        %1239 = vmatprep.subr.mxu0 0.0
        %1240 = vmatpush1.msra.mxu0 0.0
        %1241 = vmatprep.subr.mxu0 0.0
        %1242 = vmatpush1.msra.mxu0 0.0
        %1243 = vmatprep.subr.mxu0 0.0
        %1244 = vmatpush1.msra.mxu0 0.0
        %1245 = vmatprep.subr.mxu0 0.0
        %1246 = vmatpush1.msra.mxu0 %v846
        %1247 = vmatprep.subr.mxu0 0.0
        %1248 = vmatpush2.msra.mxu0 0.0
        %1249 = vmatprep.subr.mxu0 0.0
        %1250 = vmatpush2.msra.mxu0 0.0
        %1251 = vmatprep.subr.mxu0 0.0
        %1252 = vmatpush2.msra.mxu0 0.0
        %1253 = vmatprep.subr.mxu0 0.0
        %1254 = vmatpush2.msra.mxu0 0.0
        %1255 = vmatprep.subr.mxu0 0.0
        %1256 = vmatpush2.msra.mxu0 0.0
        %1257 = vmatprep.subr.mxu0 0.0
        %1258 = vmatpush2.msra.mxu0 0.0
        %1259 = vmatprep.subr.mxu0 0.0
        %1260 = vmatpush2.msra.mxu0 0.0
        %1261 = vmatprep.subr.mxu0 0.0
        %1262 = vmatpush2.msra.mxu0 0.0
        %1263 = vmatprep.subr.mxu0 0.0
        %1264 = vmatpush2.msra.mxu0 0.0
        %1265 = vmatprep.subr.mxu0 0.0
        %1266 = vmatpush2.msra.mxu0 0.0
        %1267 = vmatprep.subr.mxu0 0.0
        %1268 = vmatpush2.msra.mxu0 0.0
        %1269 = vmatprep.subr.mxu0 0.0
        %1270 = vmatpush2.msra.mxu0 0.0
        %1271 = vmatprep.subr.mxu0 0.0
        %1272 = vmatpush2.msra.mxu0 0.0
        %1273 = vmatprep.subr.mxu0 0.0
        %1274 = vmatpush2.msra.mxu0 0.0
        %1275 = vmatprep.subr.mxu0 0.0
        %1276 = vmatpush2.msra.mxu0 0.0
        %1277 = vmatprep.subr.mxu0 0.0
        %1278 = vmatpush2.msra.mxu0 0.0
        %1279 = vmatprep.mubr.f32.mxu0 0.0
        %1280 = vmatmul.mubr.f32.gmra.mxu0 %v1210
        %v1281 = vpop.f32.mrf.mxu0
        %v1282 = vadd.f32 %v1201, %v1281
        %v1283 = vpop.f32.mrf.mxu0
        %1284 = vmatprep.mubr.f32.mxu0 0.0
        %1285 = vmatmul.mubr.f32.gmra.mxu0 %v1213
        %v1286 = vpop.f32.mrf.mxu0
        %v1287 = vadd.f32 %v1206, %v1286
        %v1288 = vpop.f32.mrf.mxu0
        %1289 = vdwg.mxu0
        %s1290 = scalar_lea.vmem %s4, 64
        %v1291 = vld [vmem:[%s1290] sm:$0xff]
        %v1292 = vld [vmem:[%s1290 + $0x8] sm:$0xff]
        %v1293 = vld [vmem:[%s1290 + $0x10] sm:$0xff]
        %v1294 = vld [vmem:[%s1290 + $0x18] sm:$0xff]
        %s1295 = scalar_lea.vmem %s5, 2
        %v1296 = vld [vmem:[%s1295] sm:$0x1]
        %v1298 = vlaneseq
        %v1299 = vshrl.u32 %v1298, 7
        %v1300 = vsub.s32 0, %v1299
        %v1301 = vrot.slane %v1296, %v1300
        %1303 = vmatprep.subr.mxu0 0.0
        %1304 = vmatpush1.msra.mxu0 0.0
        %1305 = vmatprep.subr.mxu0 0.0
        %1306 = vmatpush1.msra.mxu0 0.0
        %1307 = vmatprep.subr.mxu0 0.0
        %1308 = vmatpush1.msra.mxu0 0.0
        %1309 = vmatprep.subr.mxu0 0.0
        %1310 = vmatpush1.msra.mxu0 0.0
        %1311 = vmatprep.subr.mxu0 0.0
        %1312 = vmatpush1.msra.mxu0 0.0
        %1313 = vmatprep.subr.mxu0 0.0
        %1314 = vmatpush1.msra.mxu0 0.0
        %1315 = vmatprep.subr.mxu0 0.0
        %1316 = vmatpush1.msra.mxu0 0.0
        %1317 = vmatprep.subr.mxu0 0.0
        %1318 = vmatpush1.msra.mxu0 0.0
        %1319 = vmatprep.subr.mxu0 0.0
        %1320 = vmatpush1.msra.mxu0 0.0
        %1321 = vmatprep.subr.mxu0 0.0
        %1322 = vmatpush1.msra.mxu0 0.0
        %1323 = vmatprep.subr.mxu0 0.0
        %1324 = vmatpush1.msra.mxu0 0.0
        %1325 = vmatprep.subr.mxu0 0.0
        %1326 = vmatpush1.msra.mxu0 0.0
        %1327 = vmatprep.subr.mxu0 0.0
        %1328 = vmatpush1.msra.mxu0 %v1294
        %1329 = vmatprep.subr.mxu0 0.0
        %1330 = vmatpush1.msra.mxu0 %v1293
        %1331 = vmatprep.subr.mxu0 0.0
        %1332 = vmatpush1.msra.mxu0 %v1292
        %1333 = vmatprep.subr.mxu0 0.0
        %1334 = vmatpush1.msra.mxu0 %v1291
        %1335 = vmatprep.subr.mxu0 0.0
        %1336 = vmatpush2.msra.mxu0 0.0
        %1337 = vmatprep.subr.mxu0 0.0
        %1338 = vmatpush2.msra.mxu0 0.0
        %1339 = vmatprep.subr.mxu0 0.0
        %1340 = vmatpush2.msra.mxu0 0.0
        %1341 = vmatprep.subr.mxu0 0.0
        %1342 = vmatpush2.msra.mxu0 0.0
        %1343 = vmatprep.subr.mxu0 0.0
        %1344 = vmatpush2.msra.mxu0 0.0
        %1345 = vmatprep.subr.mxu0 0.0
        %1346 = vmatpush2.msra.mxu0 0.0
        %1347 = vmatprep.subr.mxu0 0.0
        %1348 = vmatpush2.msra.mxu0 0.0
        %1349 = vmatprep.subr.mxu0 0.0
        %1350 = vmatpush2.msra.mxu0 0.0
        %1351 = vmatprep.subr.mxu0 0.0
        %1352 = vmatpush2.msra.mxu0 0.0
        %1353 = vmatprep.subr.mxu0 0.0
        %1354 = vmatpush2.msra.mxu0 0.0
        %1355 = vmatprep.subr.mxu0 0.0
        %1356 = vmatpush2.msra.mxu0 0.0
        %1357 = vmatprep.subr.mxu0 0.0
        %1358 = vmatpush2.msra.mxu0 0.0
        %1359 = vmatprep.subr.mxu0 0.0
        %1360 = vmatpush2.msra.mxu0 0.0
        %1361 = vmatprep.subr.mxu0 0.0
        %1362 = vmatpush2.msra.mxu0 0.0
        %1363 = vmatprep.subr.mxu0 0.0
        %1364 = vmatpush2.msra.mxu0 0.0
        %1365 = vmatprep.subr.mxu0 0.0
        %1366 = vmatpush2.msra.mxu0 0.0
        %1367 = vmatprep.mubr.f32.mxu0 0.0
        %1368 = vmatmul.mubr.f32.gmra.mxu0 %v575
        %v1369 = vpop.f32.mrf.mxu0
        %v1370 = vadd.f32 %v1301, %v1369
        %v1371 = vpop.f32.mrf.mxu0
        %1372 = vmatprep.mubr.f32.mxu0 0.0
        %1373 = vmatmul.mubr.f32.gmra.mxu0 %v578
        %v1374 = vpop.f32.mrf.mxu0
        %v1375 = vadd.f32 %v1301, %v1374
        %v1376 = vpop.f32.mrf.mxu0
        %1377 = vdwg.mxu0
        %v1378 = vmul.f32 %v1370, 0.35355338
        %v1379 = vmul.f32 %v1375, 0.35355338
        %s1380 = scalar_lea.vmem %s544, 16
        %v1381 = vld [vmem:[%s1380] sm:$0xff]
        %v1383 = vsel %vm658, %v1378, 0
        %v1386 = vsel %vm658, %v1379, 0
        %1388 = vmatprep.subr.mxu0 0.0
        %1389 = vmatpush1.msra.mxu0 0.0
        %1390 = vmatprep.subr.mxu0 0.0
        %1391 = vmatpush1.msra.mxu0 0.0
        %1392 = vmatprep.subr.mxu0 0.0
        %1393 = vmatpush1.msra.mxu0 0.0
        %1394 = vmatprep.subr.mxu0 0.0
        %1395 = vmatpush1.msra.mxu0 0.0
        %1396 = vmatprep.subr.mxu0 0.0
        %1397 = vmatpush1.msra.mxu0 0.0
        %1398 = vmatprep.subr.mxu0 0.0
        %1399 = vmatpush1.msra.mxu0 0.0
        %1400 = vmatprep.subr.mxu0 0.0
        %1401 = vmatpush1.msra.mxu0 0.0
        %1402 = vmatprep.subr.mxu0 0.0
        %1403 = vmatpush1.msra.mxu0 0.0
        %1404 = vmatprep.subr.mxu0 0.0
        %1405 = vmatpush1.msra.mxu0 0.0
        %1406 = vmatprep.subr.mxu0 0.0
        %1407 = vmatpush1.msra.mxu0 0.0
        %1408 = vmatprep.subr.mxu0 0.0
        %1409 = vmatpush1.msra.mxu0 0.0
        %1410 = vmatprep.subr.mxu0 0.0
        %1411 = vmatpush1.msra.mxu0 0.0
        %1412 = vmatprep.subr.mxu0 0.0
        %1413 = vmatpush1.msra.mxu0 0.0
        %1414 = vmatprep.subr.mxu0 0.0
        %1415 = vmatpush1.msra.mxu0 0.0
        %1416 = vmatprep.subr.mxu0 0.0
        %1417 = vmatpush1.msra.mxu0 0.0
        %1418 = vmatprep.subr.mxu0 0.0
        %1419 = vmatpush1.msra.mxu0 %v1381
        %1420 = vmatprep.subr.mxu0 0.0
        %1421 = vmatpush2.msra.mxu0 0.0
        %1422 = vmatprep.subr.mxu0 0.0
        %1423 = vmatpush2.msra.mxu0 0.0
        %1424 = vmatprep.subr.mxu0 0.0
        %1425 = vmatpush2.msra.mxu0 0.0
        %1426 = vmatprep.subr.mxu0 0.0
        %1427 = vmatpush2.msra.mxu0 0.0
        %1428 = vmatprep.subr.mxu0 0.0
        %1429 = vmatpush2.msra.mxu0 0.0
        %1430 = vmatprep.subr.mxu0 0.0
        %1431 = vmatpush2.msra.mxu0 0.0
        %1432 = vmatprep.subr.mxu0 0.0
        %1433 = vmatpush2.msra.mxu0 0.0
        %1434 = vmatprep.subr.mxu0 0.0
        %1435 = vmatpush2.msra.mxu0 0.0
        %1436 = vmatprep.subr.mxu0 0.0
        %1437 = vmatpush2.msra.mxu0 0.0
        %1438 = vmatprep.subr.mxu0 0.0
        %1439 = vmatpush2.msra.mxu0 0.0
        %1440 = vmatprep.subr.mxu0 0.0
        %1441 = vmatpush2.msra.mxu0 0.0
        %1442 = vmatprep.subr.mxu0 0.0
        %1443 = vmatpush2.msra.mxu0 0.0
        %1444 = vmatprep.subr.mxu0 0.0
        %1445 = vmatpush2.msra.mxu0 0.0
        %1446 = vmatprep.subr.mxu0 0.0
        %1447 = vmatpush2.msra.mxu0 0.0
        %1448 = vmatprep.subr.mxu0 0.0
        %1449 = vmatpush2.msra.mxu0 0.0
        %1450 = vmatprep.subr.mxu0 0.0
        %1451 = vmatpush2.msra.mxu0 0.0
        %1452 = vmatprep.mubr.f32.mxu0 0.0
        %1453 = vmatmul.mubr.f32.gmra.mxu0 %v1383
        %v1454 = vpop.f32.mrf.mxu0
        %v1455 = vadd.f32 %v560, %v1454
        %v1456 = vpop.f32.mrf.mxu0
        %1457 = vmatprep.mubr.f32.mxu0 0.0
        %1458 = vmatmul.mubr.f32.gmra.mxu0 %v1386
        %v1459 = vpop.f32.mrf.mxu0
        %v1460 = vadd.f32 %v560, %v1459
        %v1461 = vpop.f32.mrf.mxu0
        %1462 = vdwg.mxu0
        %v1463 = vsel %vm740, %v1455, -inf
        %1464 = vmax.xlane.f32.xlu0 %v1463
        %v1465 = vpop.xlane.xlu0 %1464
        %v1466 = vsel %vm740, %v1460, -inf
        %1467 = vmax.xlane.f32.xlu0 %v1466
        %v1468 = vpop.xlane.xlu0 %1467
        %v1469 = vsub.f32 %v1455, %v1465
        %v1470 = vsub.f32 %v1460, %v1468
        %v1471 = vmul.f32 %v1469, 1.442695
        %v1472 = vpow.pop %v1471
        %v1473 = vmul.f32 %v1470, 1.442695
        %v1474 = vpow.pop %v1473
        %v1475 = vsel %vm740, %v1472, 0.0
        %1476 = vadd.xlane.f32.xlu0 %v1475
        %v1477 = vpop.xlane.xlu0 %1476
        %v1478 = vsel %vm740, %v1474, 0.0
        %1479 = vadd.xlane.f32.xlu0 %v1478
        %v1480 = vpop.xlane.xlu0 %1479
        %v1481 = vrcp.pop %v1477
        %v1482 = vrcp.pop %v1480
        %v1483 = vmul.f32 %v1472, %v1481
        %v1484 = vmul.f32 %v1474, %v1482
        %s1485 = scalar_lea.vmem %s549, 32
        %v1486 = vld [vmem:[%s1485] sm:$0xff]
        %v1487 = vld [vmem:[%s1485 + $0x8] sm:$0xff]
        %v1489 = vsel %vm740, %v1483, 0
        %v1492 = vsel %vm740, %v1484, 0
        %1494 = vmatprep.subr.mxu0 0.0
        %1495 = vmatpush1.msra.mxu0 0.0
        %1496 = vmatprep.subr.mxu0 0.0
        %1497 = vmatpush1.msra.mxu0 0.0
        %1498 = vmatprep.subr.mxu0 0.0
        %1499 = vmatpush1.msra.mxu0 0.0
        %1500 = vmatprep.subr.mxu0 0.0
        %1501 = vmatpush1.msra.mxu0 0.0
        %1502 = vmatprep.subr.mxu0 0.0
        %1503 = vmatpush1.msra.mxu0 0.0
        %1504 = vmatprep.subr.mxu0 0.0
        %1505 = vmatpush1.msra.mxu0 0.0
        %1506 = vmatprep.subr.mxu0 0.0
        %1507 = vmatpush1.msra.mxu0 0.0
        %1508 = vmatprep.subr.mxu0 0.0
        %1509 = vmatpush1.msra.mxu0 0.0
        %1510 = vmatprep.subr.mxu0 0.0
        %1511 = vmatpush1.msra.mxu0 0.0
        %1512 = vmatprep.subr.mxu0 0.0
        %1513 = vmatpush1.msra.mxu0 0.0
        %1514 = vmatprep.subr.mxu0 0.0
        %1515 = vmatpush1.msra.mxu0 0.0
        %1516 = vmatprep.subr.mxu0 0.0
        %1517 = vmatpush1.msra.mxu0 0.0
        %1518 = vmatprep.subr.mxu0 0.0
        %1519 = vmatpush1.msra.mxu0 0.0
        %1520 = vmatprep.subr.mxu0 0.0
        %1521 = vmatpush1.msra.mxu0 0.0
        %1522 = vmatprep.subr.mxu0 0.0
        %1523 = vmatpush1.msra.mxu0 %v1487
        %1524 = vmatprep.subr.mxu0 0.0
        %1525 = vmatpush1.msra.mxu0 %v1486
        %1526 = vmatprep.subr.mxu0 0.0
        %1527 = vmatpush2.msra.mxu0 0.0
        %1528 = vmatprep.subr.mxu0 0.0
        %1529 = vmatpush2.msra.mxu0 0.0
        %1530 = vmatprep.subr.mxu0 0.0
        %1531 = vmatpush2.msra.mxu0 0.0
        %1532 = vmatprep.subr.mxu0 0.0
        %1533 = vmatpush2.msra.mxu0 0.0
        %1534 = vmatprep.subr.mxu0 0.0
        %1535 = vmatpush2.msra.mxu0 0.0
        %1536 = vmatprep.subr.mxu0 0.0
        %1537 = vmatpush2.msra.mxu0 0.0
        %1538 = vmatprep.subr.mxu0 0.0
        %1539 = vmatpush2.msra.mxu0 0.0
        %1540 = vmatprep.subr.mxu0 0.0
        %1541 = vmatpush2.msra.mxu0 0.0
        %1542 = vmatprep.subr.mxu0 0.0
        %1543 = vmatpush2.msra.mxu0 0.0
        %1544 = vmatprep.subr.mxu0 0.0
        %1545 = vmatpush2.msra.mxu0 0.0
        %1546 = vmatprep.subr.mxu0 0.0
        %1547 = vmatpush2.msra.mxu0 0.0
        %1548 = vmatprep.subr.mxu0 0.0
        %1549 = vmatpush2.msra.mxu0 0.0
        %1550 = vmatprep.subr.mxu0 0.0
        %1551 = vmatpush2.msra.mxu0 0.0
        %1552 = vmatprep.subr.mxu0 0.0
        %1553 = vmatpush2.msra.mxu0 0.0
        %1554 = vmatprep.subr.mxu0 0.0
        %1555 = vmatpush2.msra.mxu0 0.0
        %1556 = vmatprep.subr.mxu0 0.0
        %1557 = vmatpush2.msra.mxu0 0.0
        %1558 = vmatprep.mubr.f32.mxu0 0.0
        %1559 = vmatmul.mubr.f32.gmra.mxu0 %v1489
        %v1560 = vpop.f32.mrf.mxu0
        %v1561 = vadd.f32 0.0, %v1560
        %v1562 = vpop.f32.mrf.mxu0
        %1563 = vmatprep.mubr.f32.mxu0 0.0
        %1564 = vmatmul.mubr.f32.gmra.mxu0 %v1492
        %v1565 = vpop.f32.mrf.mxu0
        %v1566 = vadd.f32 0.0, %v1565
        %v1567 = vpop.f32.mrf.mxu0
        %1568 = vdwg.mxu0
        %s1569 = scalar_lea.vmem %s6, 16
        %v1570 = vld [vmem:[%s1569] sm:$0xff]
        %v1572 = vsel %vm658, %v1561, 0
        %v1575 = vsel %vm658, %v1566, 0
        %1577 = vmatprep.subr.mxu0 0.0
        %1578 = vmatpush1.msra.mxu0 0.0
        %1579 = vmatprep.subr.mxu0 0.0
        %1580 = vmatpush1.msra.mxu0 0.0
        %1581 = vmatprep.subr.mxu0 0.0
        %1582 = vmatpush1.msra.mxu0 0.0
        %1583 = vmatprep.subr.mxu0 0.0
        %1584 = vmatpush1.msra.mxu0 0.0
        %1585 = vmatprep.subr.mxu0 0.0
        %1586 = vmatpush1.msra.mxu0 0.0
        %1587 = vmatprep.subr.mxu0 0.0
        %1588 = vmatpush1.msra.mxu0 0.0
        %1589 = vmatprep.subr.mxu0 0.0
        %1590 = vmatpush1.msra.mxu0 0.0
        %1591 = vmatprep.subr.mxu0 0.0
        %1592 = vmatpush1.msra.mxu0 0.0
        %1593 = vmatprep.subr.mxu0 0.0
        %1594 = vmatpush1.msra.mxu0 0.0
        %1595 = vmatprep.subr.mxu0 0.0
        %1596 = vmatpush1.msra.mxu0 0.0
        %1597 = vmatprep.subr.mxu0 0.0
        %1598 = vmatpush1.msra.mxu0 0.0
        %1599 = vmatprep.subr.mxu0 0.0
        %1600 = vmatpush1.msra.mxu0 0.0
        %1601 = vmatprep.subr.mxu0 0.0
        %1602 = vmatpush1.msra.mxu0 0.0
        %1603 = vmatprep.subr.mxu0 0.0
        %1604 = vmatpush1.msra.mxu0 0.0
        %1605 = vmatprep.subr.mxu0 0.0
        %1606 = vmatpush1.msra.mxu0 0.0
        %1607 = vmatprep.subr.mxu0 0.0
        %1608 = vmatpush1.msra.mxu0 %v1570
        %1609 = vmatprep.subr.mxu0 0.0
        %1610 = vmatpush2.msra.mxu0 0.0
        %1611 = vmatprep.subr.mxu0 0.0
        %1612 = vmatpush2.msra.mxu0 0.0
        %1613 = vmatprep.subr.mxu0 0.0
        %1614 = vmatpush2.msra.mxu0 0.0
        %1615 = vmatprep.subr.mxu0 0.0
        %1616 = vmatpush2.msra.mxu0 0.0
        %1617 = vmatprep.subr.mxu0 0.0
        %1618 = vmatpush2.msra.mxu0 0.0
        %1619 = vmatprep.subr.mxu0 0.0
        %1620 = vmatpush2.msra.mxu0 0.0
        %1621 = vmatprep.subr.mxu0 0.0
        %1622 = vmatpush2.msra.mxu0 0.0
        %1623 = vmatprep.subr.mxu0 0.0
        %1624 = vmatpush2.msra.mxu0 0.0
        %1625 = vmatprep.subr.mxu0 0.0
        %1626 = vmatpush2.msra.mxu0 0.0
        %1627 = vmatprep.subr.mxu0 0.0
        %1628 = vmatpush2.msra.mxu0 0.0
        %1629 = vmatprep.subr.mxu0 0.0
        %1630 = vmatpush2.msra.mxu0 0.0
        %1631 = vmatprep.subr.mxu0 0.0
        %1632 = vmatpush2.msra.mxu0 0.0
        %1633 = vmatprep.subr.mxu0 0.0
        %1634 = vmatpush2.msra.mxu0 0.0
        %1635 = vmatprep.subr.mxu0 0.0
        %1636 = vmatpush2.msra.mxu0 0.0
        %1637 = vmatprep.subr.mxu0 0.0
        %1638 = vmatpush2.msra.mxu0 0.0
        %1639 = vmatprep.subr.mxu0 0.0
        %1640 = vmatpush2.msra.mxu0 0.0
        %1641 = vmatprep.mubr.f32.mxu0 0.0
        %1642 = vmatmul.mubr.f32.gmra.mxu0 %v1572
        %v1643 = vpop.f32.mrf.mxu0
        %v1644 = vadd.f32 0.0, %v1643
        %v1645 = vpop.f32.mrf.mxu0
        %1646 = vmatprep.mubr.f32.mxu0 0.0
        %1647 = vmatmul.mubr.f32.gmra.mxu0 %v1575
        %v1648 = vpop.f32.mrf.mxu0
        %v1649 = vadd.f32 0.0, %v1648
        %v1650 = vpop.f32.mrf.mxu0
        %1651 = vdwg.mxu0
        %v1652 = vadd.f32 %v1282, %v1644
        %v1653 = vadd.f32 %v1287, %v1649
        %s1654 = scalar_lea.vmem %s4, 96
        %v1655 = vld [vmem:[%s1654] sm:$0xff]
        %v1656 = vld [vmem:[%s1654 + $0x8] sm:$0xff]
        %v1657 = vld [vmem:[%s1654 + $0x10] sm:$0xff]
        %v1658 = vld [vmem:[%s1654 + $0x18] sm:$0xff]
        %s1659 = scalar_lea.vmem %s5, 3
        %v1660 = vld [vmem:[%s1659] sm:$0x1]
        %v1662 = vlaneseq
        %v1663 = vshrl.u32 %v1662, 7
        %v1664 = vsub.s32 0, %v1663
        %v1665 = vrot.slane %v1660, %v1664
        %1667 = vmatprep.subr.mxu0 0.0
        %1668 = vmatpush1.msra.mxu0 0.0
        %1669 = vmatprep.subr.mxu0 0.0
        %1670 = vmatpush1.msra.mxu0 0.0
        %1671 = vmatprep.subr.mxu0 0.0
        %1672 = vmatpush1.msra.mxu0 0.0
        %1673 = vmatprep.subr.mxu0 0.0
        %1674 = vmatpush1.msra.mxu0 0.0
        %1675 = vmatprep.subr.mxu0 0.0
        %1676 = vmatpush1.msra.mxu0 0.0
        %1677 = vmatprep.subr.mxu0 0.0
        %1678 = vmatpush1.msra.mxu0 0.0
        %1679 = vmatprep.subr.mxu0 0.0
        %1680 = vmatpush1.msra.mxu0 0.0
        %1681 = vmatprep.subr.mxu0 0.0
        %1682 = vmatpush1.msra.mxu0 0.0
        %1683 = vmatprep.subr.mxu0 0.0
        %1684 = vmatpush1.msra.mxu0 0.0
        %1685 = vmatprep.subr.mxu0 0.0
        %1686 = vmatpush1.msra.mxu0 0.0
        %1687 = vmatprep.subr.mxu0 0.0
        %1688 = vmatpush1.msra.mxu0 0.0
        %1689 = vmatprep.subr.mxu0 0.0
        %1690 = vmatpush1.msra.mxu0 0.0
        %1691 = vmatprep.subr.mxu0 0.0
        %1692 = vmatpush1.msra.mxu0 %v1658
        %1693 = vmatprep.subr.mxu0 0.0
        %1694 = vmatpush1.msra.mxu0 %v1657
        %1695 = vmatprep.subr.mxu0 0.0
        %1696 = vmatpush1.msra.mxu0 %v1656
        %1697 = vmatprep.subr.mxu0 0.0
        %1698 = vmatpush1.msra.mxu0 %v1655
        %1699 = vmatprep.subr.mxu0 0.0
        %1700 = vmatpush2.msra.mxu0 0.0
        %1701 = vmatprep.subr.mxu0 0.0
        %1702 = vmatpush2.msra.mxu0 0.0
        %1703 = vmatprep.subr.mxu0 0.0
        %1704 = vmatpush2.msra.mxu0 0.0
        %1705 = vmatprep.subr.mxu0 0.0
        %1706 = vmatpush2.msra.mxu0 0.0
        %1707 = vmatprep.subr.mxu0 0.0
        %1708 = vmatpush2.msra.mxu0 0.0
        %1709 = vmatprep.subr.mxu0 0.0
        %1710 = vmatpush2.msra.mxu0 0.0
        %1711 = vmatprep.subr.mxu0 0.0
        %1712 = vmatpush2.msra.mxu0 0.0
        %1713 = vmatprep.subr.mxu0 0.0
        %1714 = vmatpush2.msra.mxu0 0.0
        %1715 = vmatprep.subr.mxu0 0.0
        %1716 = vmatpush2.msra.mxu0 0.0
        %1717 = vmatprep.subr.mxu0 0.0
        %1718 = vmatpush2.msra.mxu0 0.0
        %1719 = vmatprep.subr.mxu0 0.0
        %1720 = vmatpush2.msra.mxu0 0.0
        %1721 = vmatprep.subr.mxu0 0.0
        %1722 = vmatpush2.msra.mxu0 0.0
        %1723 = vmatprep.subr.mxu0 0.0
        %1724 = vmatpush2.msra.mxu0 0.0
        %1725 = vmatprep.subr.mxu0 0.0
        %1726 = vmatpush2.msra.mxu0 0.0
        %1727 = vmatprep.subr.mxu0 0.0
        %1728 = vmatpush2.msra.mxu0 0.0
        %1729 = vmatprep.subr.mxu0 0.0
        %1730 = vmatpush2.msra.mxu0 0.0
        %1731 = vmatprep.mubr.f32.mxu0 0.0
        %1732 = vmatmul.mubr.f32.gmra.mxu0 %v575
        %v1733 = vpop.f32.mrf.mxu0
        %v1734 = vadd.f32 %v1665, %v1733
        %v1735 = vpop.f32.mrf.mxu0
        %1736 = vmatprep.mubr.f32.mxu0 0.0
        %1737 = vmatmul.mubr.f32.gmra.mxu0 %v578
        %v1738 = vpop.f32.mrf.mxu0
        %v1739 = vadd.f32 %v1665, %v1738
        %v1740 = vpop.f32.mrf.mxu0
        %1741 = vdwg.mxu0
        %v1742 = vmul.f32 %v1734, 0.35355338
        %v1743 = vmul.f32 %v1739, 0.35355338
        %s1744 = scalar_lea.vmem %s544, 24
        %v1745 = vld [vmem:[%s1744] sm:$0xff]
        %v1747 = vsel %vm658, %v1742, 0
        %v1750 = vsel %vm658, %v1743, 0
        %1752 = vmatprep.subr.mxu0 0.0
        %1753 = vmatpush1.msra.mxu0 0.0
        %1754 = vmatprep.subr.mxu0 0.0
        %1755 = vmatpush1.msra.mxu0 0.0
        %1756 = vmatprep.subr.mxu0 0.0
        %1757 = vmatpush1.msra.mxu0 0.0
        %1758 = vmatprep.subr.mxu0 0.0
        %1759 = vmatpush1.msra.mxu0 0.0
        %1760 = vmatprep.subr.mxu0 0.0
        %1761 = vmatpush1.msra.mxu0 0.0
        %1762 = vmatprep.subr.mxu0 0.0
        %1763 = vmatpush1.msra.mxu0 0.0
        %1764 = vmatprep.subr.mxu0 0.0
        %1765 = vmatpush1.msra.mxu0 0.0
        %1766 = vmatprep.subr.mxu0 0.0
        %1767 = vmatpush1.msra.mxu0 0.0
        %1768 = vmatprep.subr.mxu0 0.0
        %1769 = vmatpush1.msra.mxu0 0.0
        %1770 = vmatprep.subr.mxu0 0.0
        %1771 = vmatpush1.msra.mxu0 0.0
        %1772 = vmatprep.subr.mxu0 0.0
        %1773 = vmatpush1.msra.mxu0 0.0
        %1774 = vmatprep.subr.mxu0 0.0
        %1775 = vmatpush1.msra.mxu0 0.0
        %1776 = vmatprep.subr.mxu0 0.0
        %1777 = vmatpush1.msra.mxu0 0.0
        %1778 = vmatprep.subr.mxu0 0.0
        %1779 = vmatpush1.msra.mxu0 0.0
        %1780 = vmatprep.subr.mxu0 0.0
        %1781 = vmatpush1.msra.mxu0 0.0
        %1782 = vmatprep.subr.mxu0 0.0
        %1783 = vmatpush1.msra.mxu0 %v1745
        %1784 = vmatprep.subr.mxu0 0.0
        %1785 = vmatpush2.msra.mxu0 0.0
        %1786 = vmatprep.subr.mxu0 0.0
        %1787 = vmatpush2.msra.mxu0 0.0
        %1788 = vmatprep.subr.mxu0 0.0
        %1789 = vmatpush2.msra.mxu0 0.0
        %1790 = vmatprep.subr.mxu0 0.0
        %1791 = vmatpush2.msra.mxu0 0.0
        %1792 = vmatprep.subr.mxu0 0.0
        %1793 = vmatpush2.msra.mxu0 0.0
        %1794 = vmatprep.subr.mxu0 0.0
        %1795 = vmatpush2.msra.mxu0 0.0
        %1796 = vmatprep.subr.mxu0 0.0
        %1797 = vmatpush2.msra.mxu0 0.0
        %1798 = vmatprep.subr.mxu0 0.0
        %1799 = vmatpush2.msra.mxu0 0.0
        %1800 = vmatprep.subr.mxu0 0.0
        %1801 = vmatpush2.msra.mxu0 0.0
        %1802 = vmatprep.subr.mxu0 0.0
        %1803 = vmatpush2.msra.mxu0 0.0
        %1804 = vmatprep.subr.mxu0 0.0
        %1805 = vmatpush2.msra.mxu0 0.0
        %1806 = vmatprep.subr.mxu0 0.0
        %1807 = vmatpush2.msra.mxu0 0.0
        %1808 = vmatprep.subr.mxu0 0.0
        %1809 = vmatpush2.msra.mxu0 0.0
        %1810 = vmatprep.subr.mxu0 0.0
        %1811 = vmatpush2.msra.mxu0 0.0
        %1812 = vmatprep.subr.mxu0 0.0
        %1813 = vmatpush2.msra.mxu0 0.0
        %1814 = vmatprep.subr.mxu0 0.0
        %1815 = vmatpush2.msra.mxu0 0.0
        %1816 = vmatprep.mubr.f32.mxu0 0.0
        %1817 = vmatmul.mubr.f32.gmra.mxu0 %v1747
        %v1818 = vpop.f32.mrf.mxu0
        %v1819 = vadd.f32 %v560, %v1818
        %v1820 = vpop.f32.mrf.mxu0
        %1821 = vmatprep.mubr.f32.mxu0 0.0
        %1822 = vmatmul.mubr.f32.gmra.mxu0 %v1750
        %v1823 = vpop.f32.mrf.mxu0
        %v1824 = vadd.f32 %v560, %v1823
        %v1825 = vpop.f32.mrf.mxu0
        %1826 = vdwg.mxu0
        %v1827 = vsel %vm740, %v1819, -inf
        %1828 = vmax.xlane.f32.xlu0 %v1827
        %v1829 = vpop.xlane.xlu0 %1828
        %v1830 = vsel %vm740, %v1824, -inf
        %1831 = vmax.xlane.f32.xlu0 %v1830
        %v1832 = vpop.xlane.xlu0 %1831
        %v1833 = vsub.f32 %v1819, %v1829
        %v1834 = vsub.f32 %v1824, %v1832
        %v1835 = vmul.f32 %v1833, 1.442695
        %v1836 = vpow.pop %v1835
        %v1837 = vmul.f32 %v1834, 1.442695
        %v1838 = vpow.pop %v1837
        %v1839 = vsel %vm740, %v1836, 0.0
        %1840 = vadd.xlane.f32.xlu0 %v1839
        %v1841 = vpop.xlane.xlu0 %1840
        %v1842 = vsel %vm740, %v1838, 0.0
        %1843 = vadd.xlane.f32.xlu0 %v1842
        %v1844 = vpop.xlane.xlu0 %1843
        %v1845 = vrcp.pop %v1841
        %v1846 = vrcp.pop %v1844
        %v1847 = vmul.f32 %v1836, %v1845
        %v1848 = vmul.f32 %v1838, %v1846
        %s1849 = scalar_lea.vmem %s549, 48
        %v1850 = vld [vmem:[%s1849] sm:$0xff]
        %v1851 = vld [vmem:[%s1849 + $0x8] sm:$0xff]
        %v1853 = vsel %vm740, %v1847, 0
        %v1856 = vsel %vm740, %v1848, 0
        %1858 = vmatprep.subr.mxu0 0.0
        %1859 = vmatpush1.msra.mxu0 0.0
        %1860 = vmatprep.subr.mxu0 0.0
        %1861 = vmatpush1.msra.mxu0 0.0
        %1862 = vmatprep.subr.mxu0 0.0
        %1863 = vmatpush1.msra.mxu0 0.0
        %1864 = vmatprep.subr.mxu0 0.0
        %1865 = vmatpush1.msra.mxu0 0.0
        %1866 = vmatprep.subr.mxu0 0.0
        %1867 = vmatpush1.msra.mxu0 0.0
        %1868 = vmatprep.subr.mxu0 0.0
        %1869 = vmatpush1.msra.mxu0 0.0
        %1870 = vmatprep.subr.mxu0 0.0
        %1871 = vmatpush1.msra.mxu0 0.0
        %1872 = vmatprep.subr.mxu0 0.0
        %1873 = vmatpush1.msra.mxu0 0.0
        %1874 = vmatprep.subr.mxu0 0.0
        %1875 = vmatpush1.msra.mxu0 0.0
        %1876 = vmatprep.subr.mxu0 0.0
        %1877 = vmatpush1.msra.mxu0 0.0
        %1878 = vmatprep.subr.mxu0 0.0
        %1879 = vmatpush1.msra.mxu0 0.0
        %1880 = vmatprep.subr.mxu0 0.0
        %1881 = vmatpush1.msra.mxu0 0.0
        %1882 = vmatprep.subr.mxu0 0.0
        %1883 = vmatpush1.msra.mxu0 0.0
        %1884 = vmatprep.subr.mxu0 0.0
        %1885 = vmatpush1.msra.mxu0 0.0
        %1886 = vmatprep.subr.mxu0 0.0
        %1887 = vmatpush1.msra.mxu0 %v1851
        %1888 = vmatprep.subr.mxu0 0.0
        %1889 = vmatpush1.msra.mxu0 %v1850
        %1890 = vmatprep.subr.mxu0 0.0
        %1891 = vmatpush2.msra.mxu0 0.0
        %1892 = vmatprep.subr.mxu0 0.0
        %1893 = vmatpush2.msra.mxu0 0.0
        %1894 = vmatprep.subr.mxu0 0.0
        %1895 = vmatpush2.msra.mxu0 0.0
        %1896 = vmatprep.subr.mxu0 0.0
        %1897 = vmatpush2.msra.mxu0 0.0
        %1898 = vmatprep.subr.mxu0 0.0
        %1899 = vmatpush2.msra.mxu0 0.0
        %1900 = vmatprep.subr.mxu0 0.0
        %1901 = vmatpush2.msra.mxu0 0.0
        %1902 = vmatprep.subr.mxu0 0.0
        %1903 = vmatpush2.msra.mxu0 0.0
        %1904 = vmatprep.subr.mxu0 0.0
        %1905 = vmatpush2.msra.mxu0 0.0
        %1906 = vmatprep.subr.mxu0 0.0
        %1907 = vmatpush2.msra.mxu0 0.0
        %1908 = vmatprep.subr.mxu0 0.0
        %1909 = vmatpush2.msra.mxu0 0.0
        %1910 = vmatprep.subr.mxu0 0.0
        %1911 = vmatpush2.msra.mxu0 0.0
        %1912 = vmatprep.subr.mxu0 0.0
        %1913 = vmatpush2.msra.mxu0 0.0
        %1914 = vmatprep.subr.mxu0 0.0
        %1915 = vmatpush2.msra.mxu0 0.0
        %1916 = vmatprep.subr.mxu0 0.0
        %1917 = vmatpush2.msra.mxu0 0.0
        %1918 = vmatprep.subr.mxu0 0.0
        %1919 = vmatpush2.msra.mxu0 0.0
        %1920 = vmatprep.subr.mxu0 0.0
        %1921 = vmatpush2.msra.mxu0 0.0
        %1922 = vmatprep.mubr.f32.mxu0 0.0
        %1923 = vmatmul.mubr.f32.gmra.mxu0 %v1853
        %v1924 = vpop.f32.mrf.mxu0
        %v1925 = vadd.f32 0.0, %v1924
        %v1926 = vpop.f32.mrf.mxu0
        %1927 = vmatprep.mubr.f32.mxu0 0.0
        %1928 = vmatmul.mubr.f32.gmra.mxu0 %v1856
        %v1929 = vpop.f32.mrf.mxu0
        %v1930 = vadd.f32 0.0, %v1929
        %v1931 = vpop.f32.mrf.mxu0
        %1932 = vdwg.mxu0
        %s1933 = scalar_lea.vmem %s6, 24
        %v1934 = vld [vmem:[%s1933] sm:$0xff]
        %v1936 = vsel %vm658, %v1925, 0
        %v1939 = vsel %vm658, %v1930, 0
        %1941 = vmatprep.subr.mxu0 0.0
        %1942 = vmatpush1.msra.mxu0 0.0
        %1943 = vmatprep.subr.mxu0 0.0
        %1944 = vmatpush1.msra.mxu0 0.0
        %1945 = vmatprep.subr.mxu0 0.0
        %1946 = vmatpush1.msra.mxu0 0.0
        %1947 = vmatprep.subr.mxu0 0.0
        %1948 = vmatpush1.msra.mxu0 0.0
        %1949 = vmatprep.subr.mxu0 0.0
        %1950 = vmatpush1.msra.mxu0 0.0
        %1951 = vmatprep.subr.mxu0 0.0
        %1952 = vmatpush1.msra.mxu0 0.0
        %1953 = vmatprep.subr.mxu0 0.0
        %1954 = vmatpush1.msra.mxu0 0.0
        %1955 = vmatprep.subr.mxu0 0.0
        %1956 = vmatpush1.msra.mxu0 0.0
        %1957 = vmatprep.subr.mxu0 0.0
        %1958 = vmatpush1.msra.mxu0 0.0
        %1959 = vmatprep.subr.mxu0 0.0
        %1960 = vmatpush1.msra.mxu0 0.0
        %1961 = vmatprep.subr.mxu0 0.0
        %1962 = vmatpush1.msra.mxu0 0.0
        %1963 = vmatprep.subr.mxu0 0.0
        %1964 = vmatpush1.msra.mxu0 0.0
        %1965 = vmatprep.subr.mxu0 0.0
        %1966 = vmatpush1.msra.mxu0 0.0
        %1967 = vmatprep.subr.mxu0 0.0
        %1968 = vmatpush1.msra.mxu0 0.0
        %1969 = vmatprep.subr.mxu0 0.0
        %1970 = vmatpush1.msra.mxu0 0.0
        %1971 = vmatprep.subr.mxu0 0.0
        %1972 = vmatpush1.msra.mxu0 %v1934
        %1973 = vmatprep.subr.mxu0 0.0
        %1974 = vmatpush2.msra.mxu0 0.0
        %1975 = vmatprep.subr.mxu0 0.0
        %1976 = vmatpush2.msra.mxu0 0.0
        %1977 = vmatprep.subr.mxu0 0.0
        %1978 = vmatpush2.msra.mxu0 0.0
        %1979 = vmatprep.subr.mxu0 0.0
        %1980 = vmatpush2.msra.mxu0 0.0
        %1981 = vmatprep.subr.mxu0 0.0
        %1982 = vmatpush2.msra.mxu0 0.0
        %1983 = vmatprep.subr.mxu0 0.0
        %1984 = vmatpush2.msra.mxu0 0.0
        %1985 = vmatprep.subr.mxu0 0.0
        %1986 = vmatpush2.msra.mxu0 0.0
        %1987 = vmatprep.subr.mxu0 0.0
        %1988 = vmatpush2.msra.mxu0 0.0
        %1989 = vmatprep.subr.mxu0 0.0
        %1990 = vmatpush2.msra.mxu0 0.0
        %1991 = vmatprep.subr.mxu0 0.0
        %1992 = vmatpush2.msra.mxu0 0.0
        %1993 = vmatprep.subr.mxu0 0.0
        %1994 = vmatpush2.msra.mxu0 0.0
        %1995 = vmatprep.subr.mxu0 0.0
        %1996 = vmatpush2.msra.mxu0 0.0
        %1997 = vmatprep.subr.mxu0 0.0
        %1998 = vmatpush2.msra.mxu0 0.0
        %1999 = vmatprep.subr.mxu0 0.0
        %2000 = vmatpush2.msra.mxu0 0.0
        %2001 = vmatprep.subr.mxu0 0.0
        %2002 = vmatpush2.msra.mxu0 0.0
        %2003 = vmatprep.subr.mxu0 0.0
        %2004 = vmatpush2.msra.mxu0 0.0
        %2005 = vmatprep.mubr.f32.mxu0 0.0
        %2006 = vmatmul.mubr.f32.gmra.mxu0 %v1936
        %v2007 = vpop.f32.mrf.mxu0
        %v2008 = vadd.f32 0.0, %v2007
        %v2009 = vpop.f32.mrf.mxu0
        %2010 = vmatprep.mubr.f32.mxu0 0.0
        %2011 = vmatmul.mubr.f32.gmra.mxu0 %v1939
        %v2012 = vpop.f32.mrf.mxu0
        %v2013 = vadd.f32 0.0, %v2012
        %v2014 = vpop.f32.mrf.mxu0
        %2015 = vdwg.mxu0
        %v2016 = vadd.f32 %v1652, %v2008
        %v2017 = vadd.f32 %v1653, %v2013
        %v2018 = vld [vmem:[%s7] sm:$0x1]
        %v2020 = vlaneseq
        %v2021 = vshrl.u32 %v2020, 7
        %v2022 = vsub.s32 0, %v2021
        %v2023 = vrot.slane %v2018, %v2022
        %v2025 = vadd.f32 %v2016, %v2023
        %v2026 = vadd.f32 %v2017, %v2023
        %v2027 = vld [vmem:[%s8] sm:$0x1]
        %v2028 = vld [vmem:[%s9] sm:$0x1]
        %v2029 = vadd.f32 %v551, %v2025
        %v2030 = vadd.f32 %v552, %v2026
        %v2031 = vsel %vm573, %v2029, 0.0
        %2032 = vadd.xlane.f32.xlu0 %v2031
        %v2033 = vpop.xlane.xlu0 %2032
        %v2034 = vsel %vm573, %v2030, 0.0
        %2035 = vadd.xlane.f32.xlu0 %v2034
        %v2036 = vpop.xlane.xlu0 %2035
        %v2037 = vrcp.pop 32.0
        %v2038 = vmul.f32 %v2033, %v2037
        %v2039 = vmul.f32 %v2036, %v2037
        %v2040 = vsub.f32 %v2029, %v2038
        %v2041 = vsub.f32 %v2030, %v2039
        %v2042 = vmul.f32 %v2040, %v2040
        %v2043 = vmul.f32 %v2041, %v2041
        %v2044 = vsel %vm573, %v2042, 0.0
        %2045 = vadd.xlane.f32.xlu0 %v2044
        %v2046 = vpop.xlane.xlu0 %2045
        %v2047 = vsel %vm573, %v2043, 0.0
        %2048 = vadd.xlane.f32.xlu0 %v2047
        %v2049 = vpop.xlane.xlu0 %2048
        %v2050 = vmul.f32 %v2046, %v2037
        %v2051 = vmul.f32 %v2049, %v2037
        %v2052 = vadd.f32 %v2050, 1e-05
        %v2053 = vadd.f32 %v2051, 1e-05
        %v2054 = vrsqrt.pop %v2052
        %v2055 = vrsqrt.pop %v2053
        %v2056 = vmul.f32 %v2040, %v2054
        %v2057 = vmul.f32 %v2041, %v2055
        %v2059 = vlaneseq
        %v2060 = vshrl.u32 %v2059, 7
        %v2061 = vsub.s32 0, %v2060
        %v2062 = vrot.slane %v2027, %v2061
        %v2064 = vmul.f32 %v2056, %v2062
        %v2065 = vmul.f32 %v2057, %v2062
        %v2067 = vlaneseq
        %v2068 = vshrl.u32 %v2067, 7
        %v2069 = vsub.s32 0, %v2068
        %v2070 = vrot.slane %v2028, %v2069
        %v2072 = vadd.f32 %v2064, %v2070
        %v2073 = vadd.f32 %v2065, %v2070
        %v2074 = vld [vmem:[%s10] sm:$0xff]
        %v2075 = vld [vmem:[%s10 + $0x8] sm:$0xff]
        %v2076 = vld [vmem:[%s10 + $0x10] sm:$0xff]
        %v2077 = vld [vmem:[%s10 + $0x18] sm:$0xff]
        %v2078 = vld [vmem:[%s11] sm:$0x1]
        %v2080 = vlaneseq
        %v2081 = vshrl.u32 %v2080, 7
        %v2082 = vsub.s32 0, %v2081
        %v2083 = vrot.slane %v2078, %v2082
        %v2086 = vsel %vm573, %v2072, 0
        %v2089 = vsel %vm573, %v2073, 0
        %2091 = vmatprep.subr.mxu0 0.0
        %2092 = vmatpush1.msra.mxu0 0.0
        %2093 = vmatprep.subr.mxu0 0.0
        %2094 = vmatpush1.msra.mxu0 0.0
        %2095 = vmatprep.subr.mxu0 0.0
        %2096 = vmatpush1.msra.mxu0 0.0
        %2097 = vmatprep.subr.mxu0 0.0
        %2098 = vmatpush1.msra.mxu0 0.0
        %2099 = vmatprep.subr.mxu0 0.0
        %2100 = vmatpush1.msra.mxu0 0.0
        %2101 = vmatprep.subr.mxu0 0.0
        %2102 = vmatpush1.msra.mxu0 0.0
        %2103 = vmatprep.subr.mxu0 0.0
        %2104 = vmatpush1.msra.mxu0 0.0
        %2105 = vmatprep.subr.mxu0 0.0
        %2106 = vmatpush1.msra.mxu0 0.0
        %2107 = vmatprep.subr.mxu0 0.0
        %2108 = vmatpush1.msra.mxu0 0.0
        %2109 = vmatprep.subr.mxu0 0.0
        %2110 = vmatpush1.msra.mxu0 0.0
        %2111 = vmatprep.subr.mxu0 0.0
        %2112 = vmatpush1.msra.mxu0 0.0
        %2113 = vmatprep.subr.mxu0 0.0
        %2114 = vmatpush1.msra.mxu0 0.0
        %2115 = vmatprep.subr.mxu0 0.0
        %2116 = vmatpush1.msra.mxu0 %v2077
        %2117 = vmatprep.subr.mxu0 0.0
        %2118 = vmatpush1.msra.mxu0 %v2076
        %2119 = vmatprep.subr.mxu0 0.0
        %2120 = vmatpush1.msra.mxu0 %v2075
        %2121 = vmatprep.subr.mxu0 0.0
        %2122 = vmatpush1.msra.mxu0 %v2074
        %2123 = vmatprep.subr.mxu0 0.0
        %2124 = vmatpush2.msra.mxu0 0.0
        %2125 = vmatprep.subr.mxu0 0.0
        %2126 = vmatpush2.msra.mxu0 0.0
        %2127 = vmatprep.subr.mxu0 0.0
        %2128 = vmatpush2.msra.mxu0 0.0
        %2129 = vmatprep.subr.mxu0 0.0
        %2130 = vmatpush2.msra.mxu0 0.0
        %2131 = vmatprep.subr.mxu0 0.0
        %2132 = vmatpush2.msra.mxu0 0.0
        %2133 = vmatprep.subr.mxu0 0.0
        %2134 = vmatpush2.msra.mxu0 0.0
        %2135 = vmatprep.subr.mxu0 0.0
        %2136 = vmatpush2.msra.mxu0 0.0
        %2137 = vmatprep.subr.mxu0 0.0
        %2138 = vmatpush2.msra.mxu0 0.0
        %2139 = vmatprep.subr.mxu0 0.0
        %2140 = vmatpush2.msra.mxu0 0.0
        %2141 = vmatprep.subr.mxu0 0.0
        %2142 = vmatpush2.msra.mxu0 0.0
        %2143 = vmatprep.subr.mxu0 0.0
        %2144 = vmatpush2.msra.mxu0 0.0
        %2145 = vmatprep.subr.mxu0 0.0
        %2146 = vmatpush2.msra.mxu0 0.0
        %2147 = vmatprep.subr.mxu0 0.0
        %2148 = vmatpush2.msra.mxu0 0.0
        %2149 = vmatprep.subr.mxu0 0.0
        %2150 = vmatpush2.msra.mxu0 0.0
        %2151 = vmatprep.subr.mxu0 0.0
        %2152 = vmatpush2.msra.mxu0 0.0
        %2153 = vmatprep.subr.mxu0 0.0
        %2154 = vmatpush2.msra.mxu0 0.0
        %2155 = vmatprep.mubr.f32.mxu0 0.0
        %2156 = vmatmul.mubr.f32.gmra.mxu0 %v2086
        %v2157 = vpop.f32.mrf.mxu0
        %v2158 = vadd.f32 %v2083, %v2157
        %v2159 = vpop.f32.mrf.mxu0
        %2160 = vmatprep.mubr.f32.mxu0 0.0
        %2161 = vmatmul.mubr.f32.gmra.mxu0 %v2089
        %v2162 = vpop.f32.mrf.mxu0
        %v2163 = vadd.f32 %v2083, %v2162
        %v2164 = vpop.f32.mrf.mxu0
        %2165 = vdwg.mxu0
        %v2166 = vmax.f32 %v2158, 0.0
        %v2167 = vmax.f32 %v2163, 0.0
        %v2168 = vld [vmem:[%s12] sm:$0xff]
        %v2169 = vld [vmem:[%s12 + $0x8] sm:$0xff]
        %v2170 = vld [vmem:[%s12 + $0x10] sm:$0xff]
        %v2171 = vld [vmem:[%s12 + $0x18] sm:$0xff]
        %v2172 = vld [vmem:[%s12 + $0x20] sm:$0xff]
        %v2173 = vld [vmem:[%s12 + $0x28] sm:$0xff]
        %v2174 = vld [vmem:[%s12 + $0x30] sm:$0xff]
        %v2175 = vld [vmem:[%s12 + $0x38] sm:$0xff]
        %v2176 = vld [vmem:[%s13] sm:$0x1]
        %v2178 = vlaneseq
        %v2179 = vshrl.u32 %v2178, 7
        %v2180 = vsub.s32 0, %v2179
        %v2181 = vrot.slane %v2176, %v2180
        %vm2183 = vcmask 523264
        %v2185 = vsel %vm2183, %v2166, 0
        %v2188 = vsel %vm2183, %v2167, 0
        %2190 = vmatprep.subr.mxu0 0.0
        %2191 = vmatpush1.msra.mxu0 0.0
        %2192 = vmatprep.subr.mxu0 0.0
        %2193 = vmatpush1.msra.mxu0 0.0
        %2194 = vmatprep.subr.mxu0 0.0
        %2195 = vmatpush1.msra.mxu0 0.0
        %2196 = vmatprep.subr.mxu0 0.0
        %2197 = vmatpush1.msra.mxu0 0.0
        %2198 = vmatprep.subr.mxu0 0.0
        %2199 = vmatpush1.msra.mxu0 0.0
        %2200 = vmatprep.subr.mxu0 0.0
        %2201 = vmatpush1.msra.mxu0 0.0
        %2202 = vmatprep.subr.mxu0 0.0
        %2203 = vmatpush1.msra.mxu0 0.0
        %2204 = vmatprep.subr.mxu0 0.0
        %2205 = vmatpush1.msra.mxu0 0.0
        %2206 = vmatprep.subr.mxu0 0.0
        %2207 = vmatpush1.msra.mxu0 %v2175
        %2208 = vmatprep.subr.mxu0 0.0
        %2209 = vmatpush1.msra.mxu0 %v2174
        %2210 = vmatprep.subr.mxu0 0.0
        %2211 = vmatpush1.msra.mxu0 %v2173
        %2212 = vmatprep.subr.mxu0 0.0
        %2213 = vmatpush1.msra.mxu0 %v2172
        %2214 = vmatprep.subr.mxu0 0.0
        %2215 = vmatpush1.msra.mxu0 %v2171
        %2216 = vmatprep.subr.mxu0 0.0
        %2217 = vmatpush1.msra.mxu0 %v2170
        %2218 = vmatprep.subr.mxu0 0.0
        %2219 = vmatpush1.msra.mxu0 %v2169
        %2220 = vmatprep.subr.mxu0 0.0
        %2221 = vmatpush1.msra.mxu0 %v2168
        %2222 = vmatprep.subr.mxu0 0.0
        %2223 = vmatpush2.msra.mxu0 0.0
        %2224 = vmatprep.subr.mxu0 0.0
        %2225 = vmatpush2.msra.mxu0 0.0
        %2226 = vmatprep.subr.mxu0 0.0
        %2227 = vmatpush2.msra.mxu0 0.0
        %2228 = vmatprep.subr.mxu0 0.0
        %2229 = vmatpush2.msra.mxu0 0.0
        %2230 = vmatprep.subr.mxu0 0.0
        %2231 = vmatpush2.msra.mxu0 0.0
        %2232 = vmatprep.subr.mxu0 0.0
        %2233 = vmatpush2.msra.mxu0 0.0
        %2234 = vmatprep.subr.mxu0 0.0
        %2235 = vmatpush2.msra.mxu0 0.0
        %2236 = vmatprep.subr.mxu0 0.0
        %2237 = vmatpush2.msra.mxu0 0.0
        %2238 = vmatprep.subr.mxu0 0.0
        %2239 = vmatpush2.msra.mxu0 0.0
        %2240 = vmatprep.subr.mxu0 0.0
        %2241 = vmatpush2.msra.mxu0 0.0
        %2242 = vmatprep.subr.mxu0 0.0
        %2243 = vmatpush2.msra.mxu0 0.0
        %2244 = vmatprep.subr.mxu0 0.0
        %2245 = vmatpush2.msra.mxu0 0.0
        %2246 = vmatprep.subr.mxu0 0.0
        %2247 = vmatpush2.msra.mxu0 0.0
        %2248 = vmatprep.subr.mxu0 0.0
        %2249 = vmatpush2.msra.mxu0 0.0
        %2250 = vmatprep.subr.mxu0 0.0
        %2251 = vmatpush2.msra.mxu0 0.0
        %2252 = vmatprep.subr.mxu0 0.0
        %2253 = vmatpush2.msra.mxu0 0.0
        %2254 = vmatprep.mubr.f32.mxu0 0.0
        %2255 = vmatmul.mubr.f32.gmra.mxu0 %v2185
        %v2256 = vpop.f32.mrf.mxu0
        %v2257 = vadd.f32 %v2181, %v2256
        %v2258 = vpop.f32.mrf.mxu0
        %2259 = vmatprep.mubr.f32.mxu0 0.0
        %2260 = vmatmul.mubr.f32.gmra.mxu0 %v2188
        %v2261 = vpop.f32.mrf.mxu0
        %v2262 = vadd.f32 %v2181, %v2261
        %v2263 = vpop.f32.mrf.mxu0
        %2264 = vdwg.mxu0
        %v2265 = vadd.f32 %v2072, %v2257
        %v2266 = vadd.f32 %v2073, %v2262
        %v2267 = vsel %vm573, %v2265, 0.0
        %2268 = vadd.xlane.f32.xlu0 %v2267
        %v2269 = vpop.xlane.xlu0 %2268
        %v2270 = vsel %vm573, %v2266, 0.0
        %2271 = vadd.xlane.f32.xlu0 %v2270
        %v2272 = vpop.xlane.xlu0 %2271
        %v2273 = vmul.f32 %v2269, %v2037
        %v2274 = vmul.f32 %v2272, %v2037
        %v2275 = vsub.f32 %v2265, %v2273
        %v2276 = vsub.f32 %v2266, %v2274
        %v2277 = vmul.f32 %v2275, %v2275
        %v2278 = vmul.f32 %v2276, %v2276
        %v2279 = vsel %vm573, %v2277, 0.0
        %2280 = vadd.xlane.f32.xlu0 %v2279
        %v2281 = vpop.xlane.xlu0 %2280
        %v2282 = vsel %vm573, %v2278, 0.0
        %2283 = vadd.xlane.f32.xlu0 %v2282
        %v2284 = vpop.xlane.xlu0 %2283
        %v2285 = vmul.f32 %v2281, %v2037
        %v2286 = vmul.f32 %v2284, %v2037
        %v2287 = vadd.f32 %v2285, 1e-05
        %v2288 = vadd.f32 %v2286, 1e-05
        %v2289 = vrsqrt.pop %v2287
        %v2290 = vrsqrt.pop %v2288
        %v2291 = vmul.f32 %v2275, %v2289
        %v2292 = vmul.f32 %v2276, %v2290
        %v2293 = vmul.f32 %v2291, %v2062
        %v2294 = vmul.f32 %v2292, %v2062
        %v2295 = vadd.f32 %v2293, %v2070
        %v2296 = vadd.f32 %v2294, %v2070
        %2297 = vst.msk [vmem:[%s526] sm:$0xff] %vm573, %v2295
        %2298 = vst.msk [vmem:[%s526 + $0x8] sm:$0xff] %vm573, %v2296
        %s2299 = sand.u32 %s366, 1
        %s2300 = scalar_lea.sflag [#allocation3], %s2299
        %s2301 = sand.u32 %s366, 1
        %s2302 = smul.addr %s2301, 16
        %s2303 = scalar_lea.vmem [#allocation2], %s2302
        // Predicated region
        $region77: #{tpu_custom_call.1} parent=75 // pred_check
          %p2304 = pneg %p376
        $region78: #{tpu_custom_call.1} parent=75 // pred_check_branch
          %2306 = sbr.rel (%p2304) target = $region80
        $region79: #{tpu_custom_call.1} parent=75 // pred_region
          %s2307 = smul.u32 2, %s33
          %s2309 = ssub.s32 256, 256
          %2310 = vsyncadd %s2300, %s2309
          %s2311 = smul.addr %s32, 2
          %s2312 = sadd.s32 %s2307, %s2311
          %s2313 = smul.addr %s2312, 128
          %s2314 = scalar_lea.hbm %s14, %s2313
          %s2315 = sshll.u32 %s2303, 4
          %s2316 = int_to_ptr.vmem [resolvable:$true] %s2315
          %2321 = dma.vmem_to_hbm [thread:$0]  %s2316, 256, %s2314, %s2300, 128, 128, 8
        $region80: #{tpu_custom_call.1} parent=75 // pred_fallthru
          _
      $region76: #{tpu_custom_call.1} parent=5 // pred_fallthru
        _
      %p2322 = scmp.le.s32.totalorder 2, %s23
      // Predicated region
      $region81: #{tpu_custom_call.1} parent=5 // pred_check
        %p2323 = pneg %p2322
      $region82: #{tpu_custom_call.1} parent=5 // pred_check_branch
        %2325 = sbr.rel (%p2323) target = $region84
      $region83: #{tpu_custom_call.1} parent=5 // pred_region
        %s2326 = ssub.s32 %s23, 2
        // Predicated region
        $region85: #{tpu_custom_call.1} parent=83 // pred_check
          %p2327 = pneg %p382
        $region86: #{tpu_custom_call.1} parent=83 // pred_check_branch
          %2329 = sbr.rel (%p2327) target = $region88
        $region87: #{tpu_custom_call.1} parent=83 // pred_region
          %s2330 = sand.u32 %s367, 1
          %s2331 = scalar_lea.sflag [#allocation3], %s2330
          %s2332 = sand.u32 %s367, 1
          %s2333 = smul.addr %s2332, 16
          %s2334 = scalar_lea.vmem [#allocation2], %s2333
          %2335 = dma.done %s2331, 256
        $region88: #{tpu_custom_call.1} parent=83 // pred_fallthru
          _
      $region84: #{tpu_custom_call.1} parent=5 // pred_fallthru
        _
    $region6: #{tpu_custom_call.1} parent=1 // loop_footer
      %s27 = sadd.s32 1, %s23
    $region7: #{tpu_custom_call.1} parent=1 // loop_footer_branch
      %22 = sbr.rel target = $region3
    $region8: #{tpu_custom_call.1} parent=1 // loop_exit
      _
    %2336 = vsyncpa [#allocation3], 1
    %s2337 = scalar_lea.sflag [#allocation3], 1
    %2338 = vsyncpa %s2337, 1

</llo_original>
